<compile_context>
chip_gen: v6e
topology: v6e:2x2x1
jax: 0.10.0
libtpu: 0.0.40
codegen_flags: <defaults>
</compile_context>

<pallas_src>
import functools

import jax
import jax.numpy as jnp
from jax import lax
from jax.experimental import pallas as pl
from jax.experimental.pallas import tpu as pltpu

EPS = 1e-5
NEG_SLOPE = 0.01
VMEM_LIMIT = 32 * 1024 * 1024          # safe on v5e/v6e (128 MiB) and v7x (64 MiB)
MXU_DTYPE = jnp.bfloat16               # MXU operand dtype (accumulation stays f32)


def _round_up(x, m):
    return (x + m - 1) // m * m


def _pick_nblk(n, hp):
    """Images per grid step: aim ~256 rows of matmul M, keep >=2 steps (v7x)."""
    target = max(1, 256 // hp)
    if n >= 2:
        target = min(target, max(1, n // 2))
    for nb in range(min(target, n), 0, -1):
        if n % nb == 0:
            return nb
    return 1


# ---------------------------------------------------------------------------
# Kernels
# ---------------------------------------------------------------------------
def _conv_from_band(band, wcat, H, WCo):
    """3x3 conv (rows already vertically zero-padded) as ONE fused matmul.

    band : (Nblk, Hp, K)  bf16, data rows at [1, H+1), zero halo elsewhere,
                          lanes = w*Cin + ci (interior only), zero-padded to K.
    wcat : (K, 3*WCo)     bf16, [Wt_ky0 | Wt_ky1 | Wt_ky2] block-Toeplitz.
    Returns (Nblk, H, WCo) f32.
    """
    nb, hp, k = band.shape
    p = jnp.dot(band.reshape(nb * hp, k), wcat,
                preferred_element_type=jnp.float32)        # (Nblk*Hp, 3*WCo)
    p = p.reshape(nb, hp, 3 * WCo)
    # Add the three sublane-shifted, lane-aligned 128-wide slices (VPU/XLU).
    return (p[:, 0:H, 0:WCo]
            + p[:, 1:H + 1, WCo:2 * WCo]
            + p[:, 2:H + 2, 2 * WCo:3 * WCo])


def _conv_stats_kernel(rows_ref, wcat_ref, y_ref, s_ref, ss_ref, *, H, WCo):
    """Layer-1: conv3x3 + per-block BN partial statistics (f32)."""
    y = _conv_from_band(rows_ref[...], wcat_ref[...], H, WCo)
    y_ref[...] = y
    s_ref[...] = jnp.sum(y, axis=1, keepdims=True)
    ss_ref[...] = jnp.sum(y * y, axis=1, keepdims=True)


def _bn_conv_stats_kernel(y1_ref, sc_ref, sh_ref, wcat_ref,
                          y2_ref, s_ref, ss_ref, *, H, Hp, Kin, WCo):
    """Fused: BN1-apply + LeakyReLU + in-register repack + conv2 + stats2."""
    z = y1_ref[...] * sc_ref[...] + sh_ref[...]             # (Nblk, H, WC1) f32
    a = jnp.where(z >= 0, z, NEG_SLOPE * z)
    nb, _, wc = a.shape
    # Build the vertically zero-padded row band in registers (data at rows
    # [1, H+1)); aligned sublane concat + sublane-offset *read* slice only.
    pre = jnp.zeros((nb, 8, wc), jnp.float32)
    post = jnp.zeros((nb, _round_up(Hp - H - 1, 8), wc), jnp.float32)
    c = jnp.concatenate([pre, a, post], axis=1)             # data at rows [8, 8+H)
    band = c[:, 7:7 + Hp, :]                                # data at rows [1, H+1)
    if Kin > wc:   # lane-pad the contraction dim (not hit at these shapes)
        band = jnp.concatenate(
            [band, jnp.zeros((nb, Hp, Kin - wc), jnp.float32)], axis=-1)
    y = _conv_from_band(band.astype(MXU_DTYPE), wcat_ref[...], H, WCo)
    y2_ref[...] = y
    s_ref[...] = jnp.sum(y, axis=1, keepdims=True)
    ss_ref[...] = jnp.sum(y * y, axis=1, keepdims=True)


def _bn_act_kernel(y_ref, sc_ref, sh_ref, o_ref):
    """Final BN-apply + LeakyReLU, lane-dense elementwise."""
    z = y_ref[...] * sc_ref[...] + sh_ref[...]
    o_ref[...] = jnp.where(z >= 0, z, NEG_SLOPE * z)


# ---------------------------------------------------------------------------
# Wrapper helpers
# ---------------------------------------------------------------------------
def _toeplitz_cat(w_oihw, W, Kpad):
    """(Cout,Cin,3,3) -> (Kpad, 3*W*Cout) = [Wt_ky0 | Wt_ky1 | Wt_ky2], bf16.

    Wt_ky[(w_in*Cin + ci), (w_out*Cout + co)] = w[co, ci, ky, w_in - w_out + 1]
    when 0 <= w_in - w_out + 1 <= 2, else 0.  The horizontal zero-halo columns
    are dropped from the contraction (they would only multiply zeros).
    """
    Cout, Cin = w_oihw.shape[0], w_oihw.shape[1]
    wt = jnp.transpose(w_oihw.astype(jnp.float32), (2, 3, 1, 0))  # (ky,kx,Cin,Cout)
    w_in = jnp.arange(W)[:, None]
    w_out = jnp.arange(W)[None, :]
    kx = w_in - w_out + 1
    valid = (kx >= 0) & (kx <= 2)
    kx_c = jnp.clip(kx, 0, 2)
    mats = []
    for ky in range(3):
        blk = wt[ky][kx_c]                                   # (W, W, Cin, Cout)
        blk = jnp.where(valid[:, :, None, None], blk, 0.0)
        mats.append(blk.transpose(0, 2, 1, 3).reshape(W * Cin, W * Cout))
    cat = jnp.concatenate(mats, axis=-1)                     # (W*Cin, 3*W*Cout)
    if Kpad > W * Cin:
        cat = jnp.concatenate(
            [cat, jnp.zeros((Kpad - W * Cin, 3 * W * Cout), cat.dtype)], axis=0)
    return cat.astype(MXU_DTYPE)


def _pack_input_rows(x_nhwc, Hp, Kpad):
    """(N,H,W,C) -> (N, Hp, Kpad) bf16 rows: data at rows [1,H+1), lanes [0,W*C)."""
    N, H, W, C = x_nhwc.shape
    rows = jnp.zeros((N, Hp, Kpad), jnp.float32)
    rows = rows.at[:, 1:H + 1, :W * C].set(x_nhwc.reshape(N, H, W * C))
    return rows.astype(MXU_DTYPE)


def _bn_scale_shift(s_part, ss_part, gamma, beta, N, H, W, C):
    """Reduce per-block partials to lane-packed BN scale/shift (f32, tiny)."""
    cnt = float(N * H * W)
    mean = s_part.reshape(N, W, C).sum(axis=(0, 1)) / cnt
    var = jnp.maximum(ss_part.reshape(N, W, C).sum(axis=(0, 1)) / cnt - mean * mean, 0.0)
    inv = lax.rsqrt(var + EPS)
    scale_c = gamma.astype(jnp.float32) * inv
    shift_c = beta.astype(jnp.float32) - mean * scale_c
    return (jnp.tile(scale_c, W).reshape(1, 1, W * C),
            jnp.tile(shift_c, W).reshape(1, 1, W * C))


# ---------------------------------------------------------------------------
# Forward
# ---------------------------------------------------------------------------
def conv_block_forward(x_nchw, params):
    """Equivalent of conv_block.forward; input/output NCHW (PyTorch layout)."""
    (w1, _b1, g1, be1), (w2, _b2, g2, be2) = params
    N, Cin, H, W = x_nchw.shape
    Cmid, Cout = w1.shape[0], w2.shape[0]
    WC1, WC2 = W * Cmid, W * Cout
    K1 = _round_up(W * Cin, 128)
    K2 = _round_up(WC1, 128)
    Hp = _round_up(H + 2, 16)          # bf16 sublane tile -> multiple of 16
    Nblk = _pick_nblk(N, Hp)
    grid = (N // Nblk,)

    x_nhwc = jnp.transpose(x_nchw, (0, 2, 3, 1)).astype(jnp.float32)
    rows1 = _pack_input_rows(x_nhwc, Hp, K1)                 # (N, Hp, K1) bf16
    wcat1 = _toeplitz_cat(w1, W, K1)                         # (K1, 3*WC1) bf16
    wcat2 = _toeplitz_cat(w2, W, K2)                         # (K2, 3*WC2) bf16

    cparams = pltpu.CompilerParams(
        dimension_semantics=("parallel",), vmem_limit_bytes=VMEM_LIMIT)

    # Pass 1: conv1 (single fused matmul) + per-block BN1 partial stats.
    y1, s1, ss1 = pl.pallas_call(
        functools.partial(_conv_stats_kernel, H=H, WCo=WC1),
        grid=grid,
        in_specs=[
            pl.BlockSpec((Nblk, Hp, K1), lambda n: (n, 0, 0)),
            pl.BlockSpec((K1, 3 * WC1), lambda n: (0, 0)),
        ],
        out_specs=[
            pl.BlockSpec((Nblk, H, WC1), lambda n: (n, 0, 0)),
            pl.BlockSpec((Nblk, 1, WC1), lambda n: (n, 0, 0)),
            pl.BlockSpec((Nblk, 1, WC1), lambda n: (n, 0, 0)),
        ],
        out_shape=(
            jax.ShapeDtypeStruct((N, H, WC1), jnp.float32),
            jax.ShapeDtypeStruct((N, 1, WC1), jnp.float32),
            jax.ShapeDtypeStruct((N, 1, WC1), jnp.float32),
        ),
        compiler_params=cparams,
    )(rows1, wcat1)

    sc1, sh1 = _bn_scale_shift(s1, ss1, g1, be1, N, H, W, Cmid)

    # Pass 2: BN1-apply + LeakyReLU + in-register repack + conv2 + stats2.
    y2, s2, ss2 = pl.pallas_call(
        functools.partial(_bn_conv_stats_kernel, H=H, Hp=Hp, Kin=K2, WCo=WC2),
        grid=grid,
        in_specs=[
            pl.BlockSpec((Nblk, H, WC1), lambda n: (n, 0, 0)),
            pl.BlockSpec((1, 1, WC1), lambda n: (0, 0, 0)),
            pl.BlockSpec((1, 1, WC1), lambda n: (0, 0, 0)),
            pl.BlockSpec((K2, 3 * WC2), lambda n: (0, 0)),
        ],
        out_specs=[
            pl.BlockSpec((Nblk, H, WC2), lambda n: (n, 0, 0)),
            pl.BlockSpec((Nblk, 1, WC2), lambda n: (n, 0, 0)),
            pl.BlockSpec((Nblk, 1, WC2), lambda n: (n, 0, 0)),
        ],
        out_shape=(
            jax.ShapeDtypeStruct((N, H, WC2), jnp.float32),
            jax.ShapeDtypeStruct((N, 1, WC2), jnp.float32),
            jax.ShapeDtypeStruct((N, 1, WC2), jnp.float32),
        ),
        compiler_params=cparams,
    )(y1, sc1, sh1, wcat2)

    sc2, sh2 = _bn_scale_shift(s2, ss2, g2, be2, N, H, W, Cout)

    # Pass 3: final BN2-apply + LeakyReLU (lane-dense elementwise).
    act = pl.pallas_call(
        _bn_act_kernel,
        grid=grid,
        in_specs=[
            pl.BlockSpec((Nblk, H, WC2), lambda n: (n, 0, 0)),
            pl.BlockSpec((1, 1, WC2), lambda n: (0, 0, 0)),
            pl.BlockSpec((1, 1, WC2), lambda n: (0, 0, 0)),
        ],
        out_specs=pl.BlockSpec((Nblk, H, WC2), lambda n: (n, 0, 0)),
        out_shape=jax.ShapeDtypeStruct((N, H, WC2), jnp.float32),
        compiler_params=cparams,
    )(y2, sc2, sh2)

    return jnp.transpose(act.reshape(N, H, W, Cout), (0, 3, 1, 2))


# ---------------------------------------------------------------------------
# Pure-JAX reference (correctness check only; f32 end-to-end).
# ---------------------------------------------------------------------------
def _ref_layer(x_nchw, w, b, gamma, beta):
    y = lax.conv_general_dilated(
        x_nchw, w, window_strides=(1, 1), padding=((1, 1), (1, 1)),
        dimension_numbers=("NCHW", "OIHW", "NCHW"))
    y = y + b[None, :, None, None]
    mean = y.mean(axis=(0, 2, 3), keepdims=True)
    var = ((y - mean) ** 2).mean(axis=(0, 2, 3), keepdims=True)
    y = (y - mean) / jnp.sqrt(var + EPS)
    y = y * gamma[None, :, None, None] + beta[None, :, None, None]
    return jnp.where(y >= 0, y, NEG_SLOPE * y)


def _ref_forward(x_nchw, params):
    (w1, b1, g1, be1), (w2, b2, g2, be2) = params
    y = _ref_layer(x_nchw, w1, b1, g1, be1)
    y = _ref_layer(y, w2, b2, g2, be2)
    return y


if __name__ == "__main__":
    key = jax.random.PRNGKey(0)
    ch_in, ch_out = 4, 8
    N, H, W = 2, 16, 16

    k_x, k_w1, k_b1, k_w2, k_b2 = jax.random.split(key, 5)
    x = jax.random.normal(k_x, (N, ch_in, H, W), dtype=jnp.float32)

    # Deterministic synthetic parameters (shapes per nn.Conv2d / nn.BatchNorm2d).
    w1 = 0.1 * jax.random.normal(k_w1, (ch_out, ch_in, 3, 3), dtype=jnp.float32)
    b1 = 0.1 * jax.random.normal(k_b1, (ch_out,), dtype=jnp.float32)
    g1 = jnp.ones((ch_out,), jnp.float32)
    be1 = jnp.zeros((ch_out,), jnp.float32)

    w2 = 0.1 * jax.random.normal(k_w2, (ch_out, ch_out, 3, 3), dtype=jnp.float32)
    b2 = 0.1 * jax.random.normal(k_b2, (ch_out,), dtype=jnp.float32)
    g2 = jnp.ones((ch_out,), jnp.float32)
    be2 = jnp.zeros((ch_out,), jnp.float32)

    params = ((w1, b1, g1, be1), (w2, b2, g2, be2))

    out = jax.jit(conv_block_forward)(x, params)
    out = jax.block_until_ready(out)
    assert out.shape == (N, ch_out, H, W), out.shape

    # Tolerance accounts for bf16 MXU operands (accumulation/stats are f32).
    ref = _ref_forward(x, params)
    if not jnp.allclose(out, ref, rtol=5e-2, atol=5e-2):
        raise AssertionError("Pallas conv_block output mismatch vs reference")

    print("KERNEL_OK")
</pallas_src>

<mosaic_0001>
module attributes {stable_mosaic.version = 11 : i64} {
  func.func @_conv_stats_kernel(%arg0: i32, %arg1: memref<1x32x128xbf16, #tpu.memory_space<vmem>>, %arg2: memref<128x384xbf16, #tpu.memory_space<vmem>>, %arg3: memref<1x16x128xf32, #tpu.memory_space<vmem>>, %arg4: memref<1x1x128xf32, #tpu.memory_space<vmem>>, %arg5: memref<1x1x128xf32, #tpu.memory_space<vmem>>) attributes {dimension_semantics = [#tpu.dimension_semantics<parallel>], iteration_bounds = array<i64: 2>, scalar_prefetch = 0 : i64, scratch_operands = 0 : i64, tpu.core_type = #tpu.core_type<tc>, window_params = [{transform_indices = @transform_0, window_bounds = array<i64: 1, 32, 128>}, {pipeline_mode = #tpu.pipeline_mode<synchronous>, transform_indices = @transform_1, window_bounds = array<i64: 128, 384>}, {transform_indices = @transform_2, window_bounds = array<i64: 1, 16, 128>}, {transform_indices = @transform_3, window_bounds = array<i64: 1, 1, 128>}, {transform_indices = @transform_4, window_bounds = array<i64: 1, 1, 128>}]} {
    %c0 = arith.constant 0 : index
    %c0_0 = arith.constant 0 : index
    %c0_1 = arith.constant 0 : index
    %0 = vector.load %arg1[%c0, %c0_0, %c0_1] : memref<1x32x128xbf16, #tpu.memory_space<vmem>>, vector<1x32x128xbf16>
    %c0_2 = arith.constant 0 : index
    %c0_3 = arith.constant 0 : index
    %1 = vector.load %arg2[%c0_2, %c0_3] : memref<128x384xbf16, #tpu.memory_space<vmem>>, vector<128x384xbf16>
    %2 = vector.shape_cast %0 : vector<1x32x128xbf16> to vector<32x128xbf16>
    %cst = arith.constant dense<0.000000e+00> : vector<32x384xf32>
    %3 = tpu.matmul %2, %1, %cst {dimension_numbers = #tpu.dot_dimension_numbers<[1], [0], [0], [1], [0, 0, 1, 1], [], []>} : vector<32x128xbf16>, vector<128x384xbf16>, vector<32x384xf32> -> vector<32x384xf32>
    %4 = vector.shape_cast %3 : vector<32x384xf32> to vector<1x32x384xf32>
    %5 = vector.extract_strided_slice %4 {offsets = [0, 0, 0], sizes = [1, 16, 128], strides = [1, 1, 1]} : vector<1x32x384xf32> to vector<1x16x128xf32>
    %6 = vector.extract_strided_slice %4 {offsets = [0, 1, 128], sizes = [1, 16, 128], strides = [1, 1, 1]} : vector<1x32x384xf32> to vector<1x16x128xf32>
    %7 = arith.addf %5, %6 : vector<1x16x128xf32>
    %8 = vector.extract_strided_slice %4 {offsets = [0, 2, 256], sizes = [1, 16, 128], strides = [1, 1, 1]} : vector<1x32x384xf32> to vector<1x16x128xf32>
    %9 = arith.addf %7, %8 : vector<1x16x128xf32>
    %c0_4 = arith.constant 0 : index
    %c0_5 = arith.constant 0 : index
    %c0_6 = arith.constant 0 : index
    %10 = vector.load %arg3[%c0_4, %c0_5, %c0_6] : memref<1x16x128xf32, #tpu.memory_space<vmem>>, vector<1x16x128xf32>
    tpu.vector_store %arg3[%c0_4, %c0_5, %c0_6], %9 {strides = array<i32>} : memref<1x16x128xf32, #tpu.memory_space<vmem>>, vector<1x16x128xf32>,
    %cst_7 = arith.constant dense<0.000000e+00> : vector<1x128xf32>
    %11 = vector.multi_reduction <add>, %9, %cst_7 [1] : vector<1x16x128xf32> to vector<1x128xf32>
    %12 = vector.shape_cast %11 : vector<1x128xf32> to vector<1x1x128xf32>
    %c0_8 = arith.constant 0 : index
    %c0_9 = arith.constant 0 : index
    %c0_10 = arith.constant 0 : index
    %13 = vector.load %arg4[%c0_8, %c0_9, %c0_10] : memref<1x1x128xf32, #tpu.memory_space<vmem>>, vector<1x1x128xf32>
    tpu.vector_store %arg4[%c0_8, %c0_9, %c0_10], %12 {strides = array<i32>} : memref<1x1x128xf32, #tpu.memory_space<vmem>>, vector<1x1x128xf32>,
    %14 = arith.mulf %9, %9 : vector<1x16x128xf32>
    %cst_11 = arith.constant dense<0.000000e+00> : vector<1x128xf32>
    %15 = vector.multi_reduction <add>, %14, %cst_11 [1] : vector<1x16x128xf32> to vector<1x128xf32>
    %16 = vector.shape_cast %15 : vector<1x128xf32> to vector<1x1x128xf32>
    %c0_12 = arith.constant 0 : index
    %c0_13 = arith.constant 0 : index
    %c0_14 = arith.constant 0 : index
    %17 = vector.load %arg5[%c0_12, %c0_13, %c0_14] : memref<1x1x128xf32, #tpu.memory_space<vmem>>, vector<1x1x128xf32>
    tpu.vector_store %arg5[%c0_12, %c0_13, %c0_14], %16 {strides = array<i32>} : memref<1x1x128xf32, #tpu.memory_space<vmem>>, vector<1x1x128xf32>,
    return
  }
  func.func @transform_0(%arg0: i32) -> (i32, i32, i32) {
    %c0_i32 = arith.constant 0 : i32
    %c0_i32_0 = arith.constant 0 : i32
    %c0_i32_1 = arith.constant 0 : i32
    return %arg0, %c0_i32, %c0_i32_0 : i32, i32, i32
  }
  func.func @transform_1(%arg0: i32) -> (i32, i32) {
    %c0_i32 = arith.constant 0 : i32
    %c0_i32_0 = arith.constant 0 : i32
    %c0_i32_1 = arith.constant 0 : i32
    return %c0_i32, %c0_i32_0 : i32, i32
  }
  func.func @transform_2(%arg0: i32) -> (i32, i32, i32) {
    %c0_i32 = arith.constant 0 : i32
    %c0_i32_0 = arith.constant 0 : i32
    %c0_i32_1 = arith.constant 0 : i32
    return %arg0, %c0_i32, %c0_i32_0 : i32, i32, i32
  }
  func.func @transform_3(%arg0: i32) -> (i32, i32, i32) {
    %c0_i32 = arith.constant 0 : i32
    %c0_i32_0 = arith.constant 0 : i32
    %c0_i32_1 = arith.constant 0 : i32
    return %arg0, %c0_i32, %c0_i32_0 : i32, i32, i32
  }
  func.func @transform_4(%arg0: i32) -> (i32, i32, i32) {
    %c0_i32 = arith.constant 0 : i32
    %c0_i32_0 = arith.constant 0 : i32
    %c0_i32_1 = arith.constant 0 : i32
    return %arg0, %c0_i32, %c0_i32_0 : i32, i32, i32
  }
}

module attributes {stable_mosaic.version = 11 : i64} {
  func.func @_bn_conv_stats_kernel(%arg0: i32, %arg1: memref<1x16x128xf32, #tpu.memory_space<vmem>>, %arg2: memref<1x1x128xf32, #tpu.memory_space<vmem>>, %arg3: memref<1x1x128xf32, #tpu.memory_space<vmem>>, %arg4: memref<128x384xbf16, #tpu.memory_space<vmem>>, %arg5: memref<1x16x128xf32, #tpu.memory_space<vmem>>, %arg6: memref<1x1x128xf32, #tpu.memory_space<vmem>>, %arg7: memref<1x1x128xf32, #tpu.memory_space<vmem>>) attributes {dimension_semantics = [#tpu.dimension_semantics<parallel>], iteration_bounds = array<i64: 2>, scalar_prefetch = 0 : i64, scratch_operands = 0 : i64, tpu.core_type = #tpu.core_type<tc>, window_params = [{transform_indices = @transform_0, window_bounds = array<i64: 1, 16, 128>}, {pipeline_mode = #tpu.pipeline_mode<synchronous>, transform_indices = @transform_1, window_bounds = array<i64: 1, 1, 128>}, {pipeline_mode = #tpu.pipeline_mode<synchronous>, transform_indices = @transform_2, window_bounds = array<i64: 1, 1, 128>}, {pipeline_mode = #tpu.pipeline_mode<synchronous>, transform_indices = @transform_3, window_bounds = array<i64: 128, 384>}, {transform_indices = @transform_4, window_bounds = array<i64: 1, 16, 128>}, {transform_indices = @transform_5, window_bounds = array<i64: 1, 1, 128>}, {transform_indices = @transform_6, window_bounds = array<i64: 1, 1, 128>}]} {
    %c0 = arith.constant 0 : index
    %c0_0 = arith.constant 0 : index
    %c0_1 = arith.constant 0 : index
    %0 = vector.load %arg1[%c0, %c0_0, %c0_1] : memref<1x16x128xf32, #tpu.memory_space<vmem>>, vector<1x16x128xf32>
    %c0_2 = arith.constant 0 : index
    %c0_3 = arith.constant 0 : index
    %c0_4 = arith.constant 0 : index
    %1 = vector.load %arg2[%c0_2, %c0_3, %c0_4] : memref<1x1x128xf32, #tpu.memory_space<vmem>>, vector<1x1x128xf32>
    %2 = vector.broadcast %1 : vector<1x1x128xf32> to vector<1x16x128xf32>
    %3 = arith.mulf %0, %2 : vector<1x16x128xf32>
    %c0_5 = arith.constant 0 : index
    %c0_6 = arith.constant 0 : index
    %c0_7 = arith.constant 0 : index
    %4 = vector.load %arg3[%c0_5, %c0_6, %c0_7] : memref<1x1x128xf32, #tpu.memory_space<vmem>>, vector<1x1x128xf32>
    %5 = vector.broadcast %4 : vector<1x1x128xf32> to vector<1x16x128xf32>
    %6 = arith.addf %3, %5 : vector<1x16x128xf32>
    %cst = arith.constant 0.000000e+00 : f32
    %7 = vector.broadcast %cst : f32 to vector<1x16x128xf32>
    %8 = arith.cmpf oge, %6, %7 : vector<1x16x128xf32>
    %cst_8 = arith.constant 0.00999999977 : f32
    %9 = vector.broadcast %cst_8 : f32 to vector<1x16x128xf32>
    %10 = arith.mulf %9, %6 : vector<1x16x128xf32>
    %11 = arith.select %8, %6, %10 : vector<1x16x128xi1>, vector<1x16x128xf32>
    %cst_9 = arith.constant 0.000000e+00 : f32
    %12 = vector.broadcast %cst_9 : f32 to vector<1x8x128xf32>
    %cst_10 = arith.constant 0.000000e+00 : f32
    %13 = vector.broadcast %cst_10 : f32 to vector<1x16x128xf32>
    %14 = tpu.concatenate %12, %11, %13 in 1 : vector<1x8x128xf32>, vector<1x16x128xf32>, vector<1x16x128xf32> -> vector<1x40x128xf32>
    %15 = vector.extract_strided_slice %14 {offsets = [0, 7, 0], sizes = [1, 32, 128], strides = [1, 1, 1]} : vector<1x40x128xf32> to vector<1x32x128xf32>
    %16 = arith.truncf %15 : vector<1x32x128xf32> to vector<1x32x128xbf16>
    %c0_11 = arith.constant 0 : index
    %c0_12 = arith.constant 0 : index
    %17 = vector.load %arg4[%c0_11, %c0_12] : memref<128x384xbf16, #tpu.memory_space<vmem>>, vector<128x384xbf16>
    %18 = vector.shape_cast %16 : vector<1x32x128xbf16> to vector<32x128xbf16>
    %cst_13 = arith.constant dense<0.000000e+00> : vector<32x384xf32>
    %19 = tpu.matmul %18, %17, %cst_13 {dimension_numbers = #tpu.dot_dimension_numbers<[1], [0], [0], [1], [0, 0, 1, 1], [], []>} : vector<32x128xbf16>, vector<128x384xbf16>, vector<32x384xf32> -> vector<32x384xf32>
    %20 = vector.shape_cast %19 : vector<32x384xf32> to vector<1x32x384xf32>
    %21 = vector.extract_strided_slice %20 {offsets = [0, 0, 0], sizes = [1, 16, 128], strides = [1, 1, 1]} : vector<1x32x384xf32> to vector<1x16x128xf32>
    %22 = vector.extract_strided_slice %20 {offsets = [0, 1, 128], sizes = [1, 16, 128], strides = [1, 1, 1]} : vector<1x32x384xf32> to vector<1x16x128xf32>
    %23 = arith.addf %21, %22 : vector<1x16x128xf32>
    %24 = vector.extract_strided_slice %20 {offsets = [0, 2, 256], sizes = [1, 16, 128], strides = [1, 1, 1]} : vector<1x32x384xf32> to vector<1x16x128xf32>
    %25 = arith.addf %23, %24 : vector<1x16x128xf32>
    %c0_14 = arith.constant 0 : index
    %c0_15 = arith.constant 0 : index
    %c0_16 = arith.constant 0 : index
    %26 = vector.load %arg5[%c0_14, %c0_15, %c0_16] : memref<1x16x128xf32, #tpu.memory_space<vmem>>, vector<1x16x128xf32>
    tpu.vector_store %arg5[%c0_14, %c0_15, %c0_16], %25 {strides = array<i32>} : memref<1x16x128xf32, #tpu.memory_space<vmem>>, vector<1x16x128xf32>,
    %cst_17 = arith.constant dense<0.000000e+00> : vector<1x128xf32>
    %27 = vector.multi_reduction <add>, %25, %cst_17 [1] : vector<1x16x128xf32> to vector<1x128xf32>
    %28 = vector.shape_cast %27 : vector<1x128xf32> to vector<1x1x128xf32>
    %c0_18 = arith.constant 0 : index
    %c0_19 = arith.constant 0 : index
    %c0_20 = arith.constant 0 : index
    %29 = vector.load %arg6[%c0_18, %c0_19, %c0_20] : memref<1x1x128xf32, #tpu.memory_space<vmem>>, vector<1x1x128xf32>
    tpu.vector_store %arg6[%c0_18, %c0_19, %c0_20], %28 {strides = array<i32>} : memref<1x1x128xf32, #tpu.memory_space<vmem>>, vector<1x1x128xf32>,
    %30 = arith.mulf %25, %25 : vector<1x16x128xf32>
    %cst_21 = arith.constant dense<0.000000e+00> : vector<1x128xf32>
    %31 = vector.multi_reduction <add>, %30, %cst_21 [1] : vector<1x16x128xf32> to vector<1x128xf32>
    %32 = vector.shape_cast %31 : vector<1x128xf32> to vector<1x1x128xf32>
    %c0_22 = arith.constant 0 : index
    %c0_23 = arith.constant 0 : index
    %c0_24 = arith.constant 0 : index
    %33 = vector.load %arg7[%c0_22, %c0_23, %c0_24] : memref<1x1x128xf32, #tpu.memory_space<vmem>>, vector<1x1x128xf32>
    tpu.vector_store %arg7[%c0_22, %c0_23, %c0_24], %32 {strides = array<i32>} : memref<1x1x128xf32, #tpu.memory_space<vmem>>, vector<1x1x128xf32>,
    return
  }
  func.func @transform_0(%arg0: i32) -> (i32, i32, i32) {
    %c0_i32 = arith.constant 0 : i32
    %c0_i32_0 = arith.constant 0 : i32
    %c0_i32_1 = arith.constant 0 : i32
    return %arg0, %c0_i32, %c0_i32_0 : i32, i32, i32
  }
  func.func @transform_1(%arg0: i32) -> (i32, i32, i32) {
    %c0_i32 = arith.constant 0 : i32
    %c0_i32_0 = arith.constant 0 : i32
    %c0_i32_1 = arith.constant 0 : i32
    %c0_i32_2 = arith.constant 0 : i32
    return %c0_i32, %c0_i32_0, %c0_i32_1 : i32, i32, i32
  }
  func.func @transform_2(%arg0: i32) -> (i32, i32, i32) {
    %c0_i32 = arith.constant 0 : i32
    %c0_i32_0 = arith.constant 0 : i32
    %c0_i32_1 = arith.constant 0 : i32
    %c0_i32_2 = arith.constant 0 : i32
    return %c0_i32, %c0_i32_0, %c0_i32_1 : i32, i32, i32
  }
  func.func @transform_3(%arg0: i32) -> (i32, i32) {
    %c0_i32 = arith.constant 0 : i32
    %c0_i32_0 = arith.constant 0 : i32
    %c0_i32_1 = arith.constant 0 : i32
    return %c0_i32, %c0_i32_0 : i32, i32
  }
  func.func @transform_4(%arg0: i32) -> (i32, i32, i32) {
    %c0_i32 = arith.constant 0 : i32
    %c0_i32_0 = arith.constant 0 : i32
    %c0_i32_1 = arith.constant 0 : i32
    return %arg0, %c0_i32, %c0_i32_0 : i32, i32, i32
  }
  func.func @transform_5(%arg0: i32) -> (i32, i32, i32) {
    %c0_i32 = arith.constant 0 : i32
    %c0_i32_0 = arith.constant 0 : i32
    %c0_i32_1 = arith.constant 0 : i32
    return %arg0, %c0_i32, %c0_i32_0 : i32, i32, i32
  }
  func.func @transform_6(%arg0: i32) -> (i32, i32, i32) {
    %c0_i32 = arith.constant 0 : i32
    %c0_i32_0 = arith.constant 0 : i32
    %c0_i32_1 = arith.constant 0 : i32
    return %arg0, %c0_i32, %c0_i32_0 : i32, i32, i32
  }
}

module attributes {stable_mosaic.version = 11 : i64} {
  func.func @_bn_act_kernel(%arg0: i32, %arg1: memref<1x16x128xf32, #tpu.memory_space<vmem>>, %arg2: memref<1x1x128xf32, #tpu.memory_space<vmem>>, %arg3: memref<1x1x128xf32, #tpu.memory_space<vmem>>, %arg4: memref<1x16x128xf32, #tpu.memory_space<vmem>>) attributes {dimension_semantics = [#tpu.dimension_semantics<parallel>], iteration_bounds = array<i64: 2>, scalar_prefetch = 0 : i64, scratch_operands = 0 : i64, tpu.core_type = #tpu.core_type<tc>, window_params = [{transform_indices = @transform_0, window_bounds = array<i64: 1, 16, 128>}, {pipeline_mode = #tpu.pipeline_mode<synchronous>, transform_indices = @transform_1, window_bounds = array<i64: 1, 1, 128>}, {pipeline_mode = #tpu.pipeline_mode<synchronous>, transform_indices = @transform_2, window_bounds = array<i64: 1, 1, 128>}, {transform_indices = @transform_3, window_bounds = array<i64: 1, 16, 128>}]} {
    %c0 = arith.constant 0 : index
    %c0_0 = arith.constant 0 : index
    %c0_1 = arith.constant 0 : index
    %0 = vector.load %arg1[%c0, %c0_0, %c0_1] : memref<1x16x128xf32, #tpu.memory_space<vmem>>, vector<1x16x128xf32>
    %c0_2 = arith.constant 0 : index
    %c0_3 = arith.constant 0 : index
    %c0_4 = arith.constant 0 : index
    %1 = vector.load %arg2[%c0_2, %c0_3, %c0_4] : memref<1x1x128xf32, #tpu.memory_space<vmem>>, vector<1x1x128xf32>
    %2 = vector.broadcast %1 : vector<1x1x128xf32> to vector<1x16x128xf32>
    %3 = arith.mulf %0, %2 : vector<1x16x128xf32>
    %c0_5 = arith.constant 0 : index
    %c0_6 = arith.constant 0 : index
    %c0_7 = arith.constant 0 : index
    %4 = vector.load %arg3[%c0_5, %c0_6, %c0_7] : memref<1x1x128xf32, #tpu.memory_space<vmem>>, vector<1x1x128xf32>
    %5 = vector.broadcast %4 : vector<1x1x128xf32> to vector<1x16x128xf32>
    %6 = arith.addf %3, %5 : vector<1x16x128xf32>
    %cst = arith.constant 0.000000e+00 : f32
    %7 = vector.broadcast %cst : f32 to vector<1x16x128xf32>
    %8 = arith.cmpf oge, %6, %7 : vector<1x16x128xf32>
    %cst_8 = arith.constant 0.00999999977 : f32
    %9 = vector.broadcast %cst_8 : f32 to vector<1x16x128xf32>
    %10 = arith.mulf %9, %6 : vector<1x16x128xf32>
    %11 = arith.select %8, %6, %10 : vector<1x16x128xi1>, vector<1x16x128xf32>
    %c0_9 = arith.constant 0 : index
    %c0_10 = arith.constant 0 : index
    %c0_11 = arith.constant 0 : index
    %12 = vector.load %arg4[%c0_9, %c0_10, %c0_11] : memref<1x16x128xf32, #tpu.memory_space<vmem>>, vector<1x16x128xf32>
    tpu.vector_store %arg4[%c0_9, %c0_10, %c0_11], %11 {strides = array<i32>} : memref<1x16x128xf32, #tpu.memory_space<vmem>>, vector<1x16x128xf32>,
    return
  }
  func.func @transform_0(%arg0: i32) -> (i32, i32, i32) {
    %c0_i32 = arith.constant 0 : i32
    %c0_i32_0 = arith.constant 0 : i32
    %c0_i32_1 = arith.constant 0 : i32
    return %arg0, %c0_i32, %c0_i32_0 : i32, i32, i32
  }
  func.func @transform_1(%arg0: i32) -> (i32, i32, i32) {
    %c0_i32 = arith.constant 0 : i32
    %c0_i32_0 = arith.constant 0 : i32
    %c0_i32_1 = arith.constant 0 : i32
    %c0_i32_2 = arith.constant 0 : i32
    return %c0_i32, %c0_i32_0, %c0_i32_1 : i32, i32, i32
  }
  func.func @transform_2(%arg0: i32) -> (i32, i32, i32) {
    %c0_i32 = arith.constant 0 : i32
    %c0_i32_0 = arith.constant 0 : i32
    %c0_i32_1 = arith.constant 0 : i32
    %c0_i32_2 = arith.constant 0 : i32
    return %c0_i32, %c0_i32_0, %c0_i32_1 : i32, i32, i32
  }
  func.func @transform_3(%arg0: i32) -> (i32, i32, i32) {
    %c0_i32 = arith.constant 0 : i32
    %c0_i32_0 = arith.constant 0 : i32
    %c0_i32_1 = arith.constant 0 : i32
    return %arg0, %c0_i32, %c0_i32_0 : i32, i32, i32
  }
}

</mosaic_0001>

<llo_original>
// kernel: conv_block_forward.3
$region0: #{conv_block_forward.3}
  #allocation0 [shape = 'u32[]', space=smem, size = 0x4, offset = 0x4, fixed_abs, tag = 'smem constant byte address 0x4 - core index']
  #allocation1 [shape = 'u32[144,128]{1,0:T(1,128)}', space=vmem, size = 0x12000, scoped, tag = 'internal scratch']
  %s0 = inlined_call_operand.vmem [shape: bf16[2,32,128], index: 0, kind: input, shape index: {}]
  %s1 = inlined_call_operand.vmem [shape: bf16[128,384], index: 1, kind: input, shape index: {}]
  %s2 = inlined_call_operand.vmem [shape: f32[2,16,128], index: 2, kind: output, shape index: {0}]
  %s3 = inlined_call_operand.vmem [shape: f32[2,1,128], index: 3, kind: output, shape index: {1}]
  %s4 = inlined_call_operand.vmem [shape: f32[2,1,128], index: 4, kind: output, shape index: {2}]
  %5 = xla_tuple %s2, %s3, %s4
  %s6 = sld [smem:[#allocation0]]
  $region57: #{conv_block_forward.3} parent=0
    _
  %s8 = ssub.s32 1, %s6
  %s9 = scalar_select 0, %s8, %s6
  loop: start=0, step=1, limit=4
  $region2: #{conv_block_forward.3} parent=0 // loop_pre_header
    _
  $region3: #{conv_block_forward.3} parent=0 // loop_header
    %s11 = sphi 0, %s15
    %p12 = scmp.ge.s32.totalorder %s11, 4
    %s21 = sphi 0, %s23
    %s24 = sphi 0, %s21
    %s25 = sphi 0, %s24
    %s41 = sphi 0, %s25
    %s45 = sphi 0, %s45
    %s47 = sphi 0, %s45
    %s48 = sphi 0, %s47
    %s62 = sphi 0, %s48
    %s68 = sphi 0, %s70
    %s71 = sphi 0, %s68
    %s72 = sphi 0, %s71
    %s88 = sphi 0, %s72
    %s94 = sphi 0, %s96
    %s97 = sphi 0, %s94
    %s98 = sphi 0, %s97
    %s114 = sphi 0, %s98
    %s120 = sphi 0, %s122
    %s123 = sphi 0, %s120
    %s124 = sphi 0, %s123
    %s140 = sphi 0, %s124
  $region4: #{conv_block_forward.3} parent=0 // loop_header_branch
    %14 = sbr.rel (%p12) target = $region8
  $region5: #{conv_block_forward.3} parent=0 // loop_body
    %s16 = ssub.s32 %s11, 1
    %s17 = ssub.s32 %s11, 2
    %s18 = sadd.s32 %s11, 1
    %s19 = ssub.s32 %s11, %s18
    %p20 = scmp.eq.s32.totalorder %s19, 0
    %s22 = sadd.s32 %s21, 1
    %s23 = scalar_select %p20, %s21, %s22
    %p26 = pneg %p20
    %p27 = scmp.eq.s32.totalorder %s11, 1
    %p28 = por %p26, %p27
    %p29 = scmp.ne.s32.totalorder %s21, %s24
    %p30 = scmp.eq.s32.totalorder %s11, 0
    %p31 = por %p29, %p30
    %p32 = scmp.ne.s32.totalorder %s21, %s24
    %p33 = scmp.eq.s32.totalorder %s16, 1
    %p34 = por %p32, %p33
    %p35 = scmp.ne.s32.totalorder %s24, %s25
    %p36 = scmp.eq.s32.totalorder %s16, 0
    %p37 = por %p35, %p36
    %p38 = scmp.ne.s32.totalorder %s24, %s25
    %p39 = scmp.eq.s32.totalorder %s17, 1
    %p40 = por %p38, %p39
    %p42 = scmp.ne.s32.totalorder %s25, %s41
    %p43 = scmp.eq.s32.totalorder %s17, 0
    %p44 = por %p42, %p43
    %s46 = sadd.s32 %s45, 1
    %p49 = scmp.eq.s32.totalorder %s11, 1
    %p50 = scmp.ne.s32.totalorder %s45, %s47
    %p51 = scmp.eq.s32.totalorder %s11, 0
    %p52 = por %p50, %p51
    %p53 = scmp.ne.s32.totalorder %s45, %s47
    %p54 = scmp.eq.s32.totalorder %s16, 1
    %p55 = por %p53, %p54
    %p56 = scmp.ne.s32.totalorder %s47, %s48
    %p57 = scmp.eq.s32.totalorder %s16, 0
    %p58 = por %p56, %p57
    %p59 = scmp.ne.s32.totalorder %s47, %s48
    %p60 = scmp.eq.s32.totalorder %s17, 1
    %p61 = por %p59, %p60
    %p63 = scmp.ne.s32.totalorder %s48, %s62
    %p64 = scmp.eq.s32.totalorder %s17, 0
    %p65 = por %p63, %p64
    %s66 = ssub.s32 %s11, %s18
    %p67 = scmp.eq.s32.totalorder %s66, 0
    %s69 = sadd.s32 %s68, 1
    %s70 = scalar_select %p67, %s68, %s69
    %p73 = pneg %p67
    %p74 = scmp.eq.s32.totalorder %s11, 1
    %p75 = por %p73, %p74
    %p76 = scmp.ne.s32.totalorder %s68, %s71
    %p77 = scmp.eq.s32.totalorder %s11, 0
    %p78 = por %p76, %p77
    %p79 = scmp.ne.s32.totalorder %s68, %s71
    %p80 = scmp.eq.s32.totalorder %s16, 1
    %p81 = por %p79, %p80
    %p82 = scmp.ne.s32.totalorder %s71, %s72
    %p83 = scmp.eq.s32.totalorder %s16, 0
    %p84 = por %p82, %p83
    %p85 = scmp.ne.s32.totalorder %s71, %s72
    %p86 = scmp.eq.s32.totalorder %s17, 1
    %p87 = por %p85, %p86
    %p89 = scmp.ne.s32.totalorder %s72, %s88
    %p90 = scmp.eq.s32.totalorder %s17, 0
    %p91 = por %p89, %p90
    %s92 = ssub.s32 %s11, %s18
    %p93 = scmp.eq.s32.totalorder %s92, 0
    %s95 = sadd.s32 %s94, 1
    %s96 = scalar_select %p93, %s94, %s95
    %p99 = pneg %p93
    %p100 = scmp.eq.s32.totalorder %s11, 1
    %p101 = por %p99, %p100
    %p102 = scmp.ne.s32.totalorder %s94, %s97
    %p103 = scmp.eq.s32.totalorder %s11, 0
    %p104 = por %p102, %p103
    %p105 = scmp.ne.s32.totalorder %s94, %s97
    %p106 = scmp.eq.s32.totalorder %s16, 1
    %p107 = por %p105, %p106
    %p108 = scmp.ne.s32.totalorder %s97, %s98
    %p109 = scmp.eq.s32.totalorder %s16, 0
    %p110 = por %p108, %p109
    %p111 = scmp.ne.s32.totalorder %s97, %s98
    %p112 = scmp.eq.s32.totalorder %s17, 1
    %p113 = por %p111, %p112
    %p115 = scmp.ne.s32.totalorder %s98, %s114
    %p116 = scmp.eq.s32.totalorder %s17, 0
    %p117 = por %p115, %p116
    %s118 = ssub.s32 %s11, %s18
    %p119 = scmp.eq.s32.totalorder %s118, 0
    %s121 = sadd.s32 %s120, 1
    %s122 = scalar_select %p119, %s120, %s121
    %p125 = pneg %p119
    %p126 = scmp.eq.s32.totalorder %s11, 1
    %p127 = por %p125, %p126
    %p128 = scmp.ne.s32.totalorder %s120, %s123
    %p129 = scmp.eq.s32.totalorder %s11, 0
    %p130 = por %p128, %p129
    %p131 = scmp.ne.s32.totalorder %s120, %s123
    %p132 = scmp.eq.s32.totalorder %s16, 1
    %p133 = por %p131, %p132
    %p134 = scmp.ne.s32.totalorder %s123, %s124
    %p135 = scmp.eq.s32.totalorder %s16, 0
    %p136 = por %p134, %p135
    %p137 = scmp.ne.s32.totalorder %s123, %s124
    %p138 = scmp.eq.s32.totalorder %s17, 1
    %p139 = por %p137, %p138
    %p141 = scmp.ne.s32.totalorder %s124, %s140
    %p142 = scmp.eq.s32.totalorder %s17, 0
    %p143 = por %p141, %p142
    %p144 = scmp.le.s32.totalorder 1, %s11
    %p145 = scmp.lt.s32.totalorder %s11, 3
    %p146 = pnand %p144, %p145
    %p147 = pneg %p146
    // Predicated region
    $region9: #{conv_block_forward.3} parent=5 // pred_check
      _
    $region10: #{conv_block_forward.3} parent=5 // pred_check_branch
      %149 = sbr.rel (%p146) target = $region12
    $region11: #{conv_block_forward.3} parent=5 // pred_region
      %s150 = ssub.s32 %s11, 1
      // Predicated region
      $region13: #{conv_block_forward.3} parent=11 // pred_check
        %p151 = pneg %p58
      $region14: #{conv_block_forward.3} parent=11 // pred_check_branch
        %153 = sbr.rel (%p151) target = $region16
      $region15: #{conv_block_forward.3} parent=11 // pred_region
        _
      $region16: #{conv_block_forward.3} parent=11 // pred_fallthru
        _
    $region12: #{conv_block_forward.3} parent=5 // pred_fallthru
      _
    %p154 = scmp.lt.s32.totalorder %s11, 2
    // Predicated region
    $region17: #{conv_block_forward.3} parent=5 // pred_check
      %p155 = pneg %p154
    $region18: #{conv_block_forward.3} parent=5 // pred_check_branch
      %157 = sbr.rel (%p155) target = $region20
    $region19: #{conv_block_forward.3} parent=5 // pred_region
      // Predicated region
      $region21: #{conv_block_forward.3} parent=19 // pred_check
        %p158 = pneg %p31
      $region22: #{conv_block_forward.3} parent=19 // pred_check_branch
        %160 = sbr.rel (%p158) target = $region24
      $region23: #{conv_block_forward.3} parent=19 // pred_region
        %p161 = scmp.lt.s32.totalorder %s11, 1
        %s162 = scalar_select %p161, %s11, 1
        %s163 = smul.addr %s162, 4
        %s164 = smul.addr %s163, 4
        %s165 = scalar_lea.vmem %s0, %s164
      $region24: #{conv_block_forward.3} parent=19 // pred_fallthru
        _
    $region20: #{conv_block_forward.3} parent=5 // pred_fallthru
      _
    %p166 = scmp.le.s32.totalorder 1, %s11
    %p167 = scmp.lt.s32.totalorder %s11, 3
    %p168 = pnand %p166, %p167
    %p169 = pneg %p168
    // Predicated region
    $region25: #{conv_block_forward.3} parent=5 // pred_check
      _
    $region26: #{conv_block_forward.3} parent=5 // pred_check_branch
      %171 = sbr.rel (%p168) target = $region28
    $region27: #{conv_block_forward.3} parent=5 // pred_region
      %s172 = ssub.s32 %s11, 1
      %p173 = scmp.lt.s32.totalorder %s16, 1
      %s174 = scalar_select %p173, %s16, 1
      %s175 = smul.addr %s174, 4
      %s176 = smul.addr %s175, 4
      %s177 = scalar_lea.vmem %s0, %s176
      %p178 = pneg %p37
      %p179 = pneg %p34
      %p180 = pneg %p58
      %p181 = pneg %p55
      %p182 = pneg %p84
      %p183 = pneg %p81
      %p184 = scmp.lt.s32.totalorder %s16, 1
      %s185 = scalar_select %p184, %s16, 1
      %s186 = smul.addr %s185, 2
      %s187 = smul.addr %s186, 8
      %s188 = scalar_lea.vmem %s2, %s187
      %p189 = pneg %p110
      %p190 = pneg %p107
      %p191 = scmp.lt.s32.totalorder %s16, 1
      %s192 = scalar_select %p191, %s16, 1
      %s193 = scalar_lea.vmem %s3, %s192
      %p194 = pneg %p136
      %p195 = pneg %p133
      %p196 = scmp.lt.s32.totalorder %s16, 1
      %s197 = scalar_select %p196, %s16, 1
      %s198 = scalar_lea.vmem %s4, %s197
      %p199 = scmp.lt.s32.totalorder %s16, 1
      %s200 = scalar_select %p199, %s16, 1
      %s201 = smul.addr %s200, 4
      %s202 = smul.addr %s201, 4
      %s203 = scalar_lea.vmem %s0, %s202
      %p204 = scmp.lt.s32.totalorder %s16, 1
      %s205 = scalar_select %p204, %s16, 1
      %s206 = smul.addr %s205, 2
      %s207 = smul.addr %s206, 8
      %s208 = scalar_lea.vmem %s2, %s207
      %p209 = scmp.lt.s32.totalorder %s16, 1
      %s210 = scalar_select %p209, %s16, 1
      %s211 = scalar_lea.vmem %s3, %s210
      %p212 = scmp.lt.s32.totalorder %s16, 1
      %s213 = scalar_select %p212, %s16, 1
      %s214 = scalar_lea.vmem %s4, %s213
      %v216 = vld [vmem:[%s203] sm:$0xf]
      %v217 = vld [vmem:[%s203 + $0x4] sm:$0xf]
      %v218 = vld [vmem:[%s203 + $0x8] sm:$0xf]
      %v219 = vld [vmem:[%s203 + $0xc] sm:$0xf]
      %v220 = vld [vmem:[%s1] sm:$0xff]
      %v221 = vld [vmem:[%s1 + $0x8] sm:$0xf]
      %v222 = vld [vmem:[%s1 + $0xc] sm:$0xff]
      %v223 = vld [vmem:[%s1 + $0x14] sm:$0xf]
      %v224 = vld [vmem:[%s1 + $0x18] sm:$0xff]
      %v225 = vld [vmem:[%s1 + $0x20] sm:$0xf]
      %v226 = vld [vmem:[%s1 + $0x24] sm:$0xff]
      %v227 = vld [vmem:[%s1 + $0x2c] sm:$0xf]
      %v228 = vld [vmem:[%s1 + $0x30] sm:$0xff]
      %v229 = vld [vmem:[%s1 + $0x38] sm:$0xf]
      %v230 = vld [vmem:[%s1 + $0x3c] sm:$0xff]
      %v231 = vld [vmem:[%s1 + $0x44] sm:$0xf]
      %v232 = vld [vmem:[%s1 + $0x48] sm:$0xff]
      %v233 = vld [vmem:[%s1 + $0x50] sm:$0xf]
      %v234 = vld [vmem:[%s1 + $0x54] sm:$0xff]
      %v235 = vld [vmem:[%s1 + $0x5c] sm:$0xf]
      %v236 = vld [vmem:[%s1 + $0x60] sm:$0xff]
      %v237 = vld [vmem:[%s1 + $0x68] sm:$0xf]
      %v238 = vld [vmem:[%s1 + $0x6c] sm:$0xff]
      %v239 = vld [vmem:[%s1 + $0x74] sm:$0xf]
      %v240 = vld [vmem:[%s1 + $0x78] sm:$0xff]
      %v241 = vld [vmem:[%s1 + $0x80] sm:$0xf]
      %v242 = vld [vmem:[%s1 + $0x84] sm:$0xff]
      %v243 = vld [vmem:[%s1 + $0x8c] sm:$0xf]
      %v244 = vld [vmem:[%s1 + $0x90] sm:$0xff]
      %v245 = vld [vmem:[%s1 + $0x98] sm:$0xf]
      %v246 = vld [vmem:[%s1 + $0x9c] sm:$0xff]
      %v247 = vld [vmem:[%s1 + $0xa4] sm:$0xf]
      %v248 = vld [vmem:[%s1 + $0xa8] sm:$0xff]
      %v249 = vld [vmem:[%s1 + $0xb0] sm:$0xf]
      %v250 = vld [vmem:[%s1 + $0xb4] sm:$0xff]
      %v251 = vld [vmem:[%s1 + $0xbc] sm:$0xf]
      %v256 = vunpack.c.l.b16 %v216
      %v257 = vunpack.c.l.b16 %v217
      %v258 = vunpack.c.l.b16 %v218
      %v259 = vunpack.c.l.b16 %v219
      %v260 = vpack.c.b16 %v257, %v256
      %v261 = vpack.c.b16 %v259, %v258
      %v296 = vunpack.c.l.b16 %v220
      %v297 = vunpack.c.h.b16 %v220
      %v298 = vunpack.c.l.b16 %v221
      %v299 = vunpack.c.l.b16 %v222
      %v300 = vunpack.c.h.b16 %v222
      %v301 = vunpack.c.l.b16 %v223
      %v302 = vunpack.c.l.b16 %v224
      %v303 = vunpack.c.h.b16 %v224
      %v304 = vunpack.c.l.b16 %v225
      %v305 = vunpack.c.l.b16 %v226
      %v306 = vunpack.c.h.b16 %v226
      %v307 = vunpack.c.l.b16 %v227
      %v308 = vunpack.c.l.b16 %v228
      %v309 = vunpack.c.h.b16 %v228
      %v310 = vunpack.c.l.b16 %v229
      %v311 = vunpack.c.l.b16 %v230
      %v312 = vunpack.c.h.b16 %v230
      %v313 = vunpack.c.l.b16 %v231
      %v314 = vunpack.c.l.b16 %v232
      %v315 = vunpack.c.h.b16 %v232
      %v316 = vunpack.c.l.b16 %v233
      %v317 = vunpack.c.l.b16 %v234
      %v318 = vunpack.c.h.b16 %v234
      %v319 = vunpack.c.l.b16 %v235
      %v320 = vunpack.c.l.b16 %v236
      %v321 = vunpack.c.h.b16 %v236
      %v322 = vunpack.c.l.b16 %v237
      %v323 = vunpack.c.l.b16 %v238
      %v324 = vunpack.c.h.b16 %v238
      %v325 = vunpack.c.l.b16 %v239
      %v326 = vunpack.c.l.b16 %v240
      %v327 = vunpack.c.h.b16 %v240
      %v328 = vunpack.c.l.b16 %v241
      %v329 = vunpack.c.l.b16 %v242
      %v330 = vunpack.c.h.b16 %v242
      %v331 = vunpack.c.l.b16 %v243
      %v332 = vunpack.c.l.b16 %v244
      %v333 = vunpack.c.h.b16 %v244
      %v334 = vunpack.c.l.b16 %v245
      %v335 = vunpack.c.l.b16 %v246
      %v336 = vunpack.c.h.b16 %v246
      %v337 = vunpack.c.l.b16 %v247
      %v338 = vunpack.c.l.b16 %v248
      %v339 = vunpack.c.h.b16 %v248
      %v340 = vunpack.c.l.b16 %v249
      %v341 = vunpack.c.l.b16 %v250
      %v342 = vunpack.c.h.b16 %v250
      %v343 = vunpack.c.l.b16 %v251
      %v344 = vpack.c.b16 %v299, %v296
      %v345 = vpack.c.b16 %v300, %v297
      %v346 = vpack.c.b16 %v301, %v298
      %v347 = vpack.c.b16 %v305, %v302
      %v348 = vpack.c.b16 %v306, %v303
      %v349 = vpack.c.b16 %v307, %v304
      %v350 = vpack.c.b16 %v311, %v308
      %v351 = vpack.c.b16 %v312, %v309
      %v352 = vpack.c.b16 %v313, %v310
      %v353 = vpack.c.b16 %v317, %v314
      %v354 = vpack.c.b16 %v318, %v315
      %v355 = vpack.c.b16 %v319, %v316
      %v356 = vpack.c.b16 %v323, %v320
      %v357 = vpack.c.b16 %v324, %v321
      %v358 = vpack.c.b16 %v325, %v322
      %v359 = vpack.c.b16 %v329, %v326
      %v360 = vpack.c.b16 %v330, %v327
      %v361 = vpack.c.b16 %v331, %v328
      %v362 = vpack.c.b16 %v335, %v332
      %v363 = vpack.c.b16 %v336, %v333
      %v364 = vpack.c.b16 %v337, %v334
      %v365 = vpack.c.b16 %v341, %v338
      %v366 = vpack.c.b16 %v342, %v339
      %v367 = vpack.c.b16 %v343, %v340
      %392 = vmatprep.subr.bf16.mxu0 %v366
      %393 = vmatpush1.bf16.msra.mxu0 %v365
      %394 = vmatprep.subr.bf16.mxu0 %v363
      %395 = vmatpush1.bf16.msra.mxu0 %v362
      %396 = vmatprep.subr.bf16.mxu0 %v360
      %397 = vmatpush1.bf16.msra.mxu0 %v359
      %398 = vmatprep.subr.bf16.mxu0 %v357
      %399 = vmatpush1.bf16.msra.mxu0 %v356
      %400 = vmatprep.subr.bf16.mxu0 %v354
      %401 = vmatpush1.bf16.msra.mxu0 %v353
      %402 = vmatprep.subr.bf16.mxu0 %v351
      %403 = vmatpush1.bf16.msra.mxu0 %v350
      %404 = vmatprep.subr.bf16.mxu0 %v348
      %405 = vmatpush1.bf16.msra.mxu0 %v347
      %406 = vmatprep.subr.bf16.mxu0 %v345
      %407 = vmatpush1.bf16.msra.mxu0 %v344
      %408 = vmatprep.subr.bf16.mxu0 0
      %409 = vmatpush2.bf16.msra.mxu0 0
      %410 = vmatprep.subr.bf16.mxu0 0
      %411 = vmatpush2.bf16.msra.mxu0 0
      %412 = vmatprep.subr.bf16.mxu0 0
      %413 = vmatpush2.bf16.msra.mxu0 0
      %414 = vmatprep.subr.bf16.mxu0 0
      %415 = vmatpush2.bf16.msra.mxu0 0
      %416 = vmatprep.subr.bf16.mxu0 0
      %417 = vmatpush2.bf16.msra.mxu0 0
      %418 = vmatprep.subr.bf16.mxu0 0
      %419 = vmatpush2.bf16.msra.mxu0 0
      %420 = vmatprep.subr.bf16.mxu0 0
      %421 = vmatpush2.bf16.msra.mxu0 0
      %422 = vmatprep.subr.bf16.mxu0 0
      %423 = vmatpush2.bf16.msra.mxu0 0
      %424 = vmatprep.mubr.bf16.mxu0 0
      %425 = vmatmul.mubr.bf16.gmra.mxu0 %v260
      %v426 = vpop.f32.mrf.mxu0
      %v427 = vadd.f32 0.0, %v426
      %v428 = vpop.f32.mrf.mxu0
      %v429 = vadd.f32 0.0, %v428
      %v430 = vpop.f32.mrf.mxu0
      %v431 = vadd.f32 0.0, %v430
      %v432 = vpop.f32.mrf.mxu0
      %v433 = vadd.f32 0.0, %v432
      %434 = vmatprep.mubr.bf16.mxu0 0
      %435 = vmatmul.mubr.bf16.gmra.mxu0 %v261
      %v436 = vpop.f32.mrf.mxu0
      %v437 = vpop.f32.mrf.mxu0
      %v438 = vadd.f32 0.0, %v437
      %v439 = vpop.f32.mrf.mxu0
      %v440 = vpop.f32.mrf.mxu0
      %441 = vdwg.mxu0
      %442 = vmatprep.subr.bf16.mxu0 0
      %443 = vmatpush1.bf16.msra.mxu0 %v367
      %444 = vmatprep.subr.bf16.mxu0 0
      %445 = vmatpush1.bf16.msra.mxu0 %v364
      %446 = vmatprep.subr.bf16.mxu0 0
      %447 = vmatpush1.bf16.msra.mxu0 %v361
      %448 = vmatprep.subr.bf16.mxu0 0
      %449 = vmatpush1.bf16.msra.mxu0 %v358
      %450 = vmatprep.subr.bf16.mxu0 0
      %451 = vmatpush1.bf16.msra.mxu0 %v355
      %452 = vmatprep.subr.bf16.mxu0 0
      %453 = vmatpush1.bf16.msra.mxu0 %v352
      %454 = vmatprep.subr.bf16.mxu0 0
      %455 = vmatpush1.bf16.msra.mxu0 %v349
      %456 = vmatprep.subr.bf16.mxu0 0
      %457 = vmatpush1.bf16.msra.mxu0 %v346
      %458 = vmatprep.subr.bf16.mxu0 0
      %459 = vmatpush2.bf16.msra.mxu0 0
      %460 = vmatprep.subr.bf16.mxu0 0
      %461 = vmatpush2.bf16.msra.mxu0 0
      %462 = vmatprep.subr.bf16.mxu0 0
      %463 = vmatpush2.bf16.msra.mxu0 0
      %464 = vmatprep.subr.bf16.mxu0 0
      %465 = vmatpush2.bf16.msra.mxu0 0
      %466 = vmatprep.subr.bf16.mxu0 0
      %467 = vmatpush2.bf16.msra.mxu0 0
      %468 = vmatprep.subr.bf16.mxu0 0
      %469 = vmatpush2.bf16.msra.mxu0 0
      %470 = vmatprep.subr.bf16.mxu0 0
      %471 = vmatpush2.bf16.msra.mxu0 0
      %472 = vmatprep.subr.bf16.mxu0 0
      %473 = vmatpush2.bf16.msra.mxu0 0
      %474 = vmatprep.mubr.bf16.mxu0 0
      %475 = vmatmul.mubr.bf16.gmra.mxu0 %v260
      %v476 = vpop.f32.mrf.mxu0
      %v477 = vadd.f32 0.0, %v476
      %v478 = vpop.f32.mrf.mxu0
      %v479 = vpop.f32.mrf.mxu0
      %v480 = vadd.f32 0.0, %v479
      %v481 = vpop.f32.mrf.mxu0
      %482 = vmatprep.mubr.bf16.mxu0 0
      %483 = vmatmul.mubr.bf16.gmra.mxu0 %v261
      %v484 = vpop.f32.mrf.mxu0
      %v485 = vadd.f32 0.0, %v484
      %v486 = vpop.f32.mrf.mxu0
      %v487 = vpop.f32.mrf.mxu0
      %v488 = vpop.f32.mrf.mxu0
      %489 = vdwg.mxu0
      %vm493 = vcmask 1046528
      %v494 = vrot.slane %v429, 1
      %v495 = vrot.slane %v433, 1
      %v496 = vsel %vm493, %v494, %v495
      %v497 = vrot.slane %v438, 1
      %v498 = vsel %vm493, %v495, %v497
      %v501 = vadd.f32 %v427, %v496
      %v502 = vadd.f32 %v431, %v498
      %vm506 = vcmask 1045504
      %v507 = vrot.slane %v477, 2
      %v508 = vrot.slane %v480, 2
      %v509 = vsel %vm506, %v507, %v508
      %v510 = vrot.slane %v485, 2
      %v511 = vsel %vm506, %v508, %v510
      %v514 = vadd.f32 %v501, %v509
      %v515 = vadd.f32 %v502, %v511
      %516 = vst [vmem:[%s208] sm:$0xff] %v514
      %517 = vst [vmem:[%s208 + $0x8] sm:$0xff] %v515
      %v518 = vadd.f32 %v514, %v515
      %v519 = vrot.slane %v518, 4
      %v520 = vadd.f32 %v518, %v519
      %v521 = vrot.slane %v520, 2
      %v522 = vadd.f32 %v520, %v521
      %v523 = vrot.slane %v522, 1
      %v524 = vadd.f32 %v522, %v523
      %525 = vst [vmem:[%s211] sm:$0x1] %v524
      %v526 = vmul.f32 %v514, %v514
      %v527 = vmul.f32 %v515, %v515
      %v528 = vadd.f32 %v526, %v527
      %v529 = vrot.slane %v528, 4
      %v530 = vadd.f32 %v528, %v529
      %v531 = vrot.slane %v530, 2
      %v532 = vadd.f32 %v530, %v531
      %v533 = vrot.slane %v532, 1
      %v534 = vadd.f32 %v532, %v533
      %535 = vst [vmem:[%s214] sm:$0x1] %v534
      %p536 = scmp.lt.s32.totalorder %s16, 1
      %s537 = scalar_select %p536, %s16, 1
      %s538 = smul.addr %s537, 2
      %s539 = smul.addr %s538, 8
      %s540 = scalar_lea.vmem %s2, %s539
      %p541 = scmp.lt.s32.totalorder %s16, 1
      %s542 = scalar_select %p541, %s16, 1
      %s543 = scalar_lea.vmem %s3, %s542
      %p544 = scmp.lt.s32.totalorder %s16, 1
      %s545 = scalar_select %p544, %s16, 1
      %s546 = scalar_lea.vmem %s4, %s545
      // Predicated region
      $region29: #{conv_block_forward.3} parent=27 // pred_check
        %p547 = pneg %p81
      $region30: #{conv_block_forward.3} parent=27 // pred_check_branch
        %549 = sbr.rel (%p547) target = $region32
      $region31: #{conv_block_forward.3} parent=27 // pred_region
        _
      $region32: #{conv_block_forward.3} parent=27 // pred_fallthru
        _
      // Predicated region
      $region33: #{conv_block_forward.3} parent=27 // pred_check
        %p550 = pneg %p107
      $region34: #{conv_block_forward.3} parent=27 // pred_check_branch
        %552 = sbr.rel (%p550) target = $region36
      $region35: #{conv_block_forward.3} parent=27 // pred_region
        _
      $region36: #{conv_block_forward.3} parent=27 // pred_fallthru
        _
      // Predicated region
      $region37: #{conv_block_forward.3} parent=27 // pred_check
        %p553 = pneg %p133
      $region38: #{conv_block_forward.3} parent=27 // pred_check_branch
        %555 = sbr.rel (%p553) target = $region40
      $region39: #{conv_block_forward.3} parent=27 // pred_region
        _
      $region40: #{conv_block_forward.3} parent=27 // pred_fallthru
        _
    $region28: #{conv_block_forward.3} parent=5 // pred_fallthru
      _
    %p556 = scmp.le.s32.totalorder 2, %s11
    // Predicated region
    $region41: #{conv_block_forward.3} parent=5 // pred_check
      %p557 = pneg %p556
    $region42: #{conv_block_forward.3} parent=5 // pred_check_branch
      %559 = sbr.rel (%p557) target = $region44
    $region43: #{conv_block_forward.3} parent=5 // pred_region
      %s560 = ssub.s32 %s11, 2
      // Predicated region
      $region45: #{conv_block_forward.3} parent=43 // pred_check
        %p561 = pneg %p87
      $region46: #{conv_block_forward.3} parent=43 // pred_check_branch
        %563 = sbr.rel (%p561) target = $region48
      $region47: #{conv_block_forward.3} parent=43 // pred_region
        %p564 = scmp.lt.s32.totalorder %s17, 1
        %s565 = scalar_select %p564, %s17, 1
        %s566 = smul.addr %s565, 2
        %s567 = smul.addr %s566, 8
        %s568 = scalar_lea.vmem %s2, %s567
      $region48: #{conv_block_forward.3} parent=43 // pred_fallthru
        _
      // Predicated region
      $region49: #{conv_block_forward.3} parent=43 // pred_check
        %p569 = pneg %p113
      $region50: #{conv_block_forward.3} parent=43 // pred_check_branch
        %571 = sbr.rel (%p569) target = $region52
      $region51: #{conv_block_forward.3} parent=43 // pred_region
        %p572 = scmp.lt.s32.totalorder %s17, 1
        %s573 = scalar_select %p572, %s17, 1
        %s574 = scalar_lea.vmem %s3, %s573
      $region52: #{conv_block_forward.3} parent=43 // pred_fallthru
        _
      // Predicated region
      $region53: #{conv_block_forward.3} parent=43 // pred_check
        %p575 = pneg %p139
      $region54: #{conv_block_forward.3} parent=43 // pred_check_branch
        %577 = sbr.rel (%p575) target = $region56
      $region55: #{conv_block_forward.3} parent=43 // pred_region
        %p578 = scmp.lt.s32.totalorder %s17, 1
        %s579 = scalar_select %p578, %s17, 1
        %s580 = scalar_lea.vmem %s4, %s579
      $region56: #{conv_block_forward.3} parent=43 // pred_fallthru
        _
    $region44: #{conv_block_forward.3} parent=5 // pred_fallthru
      _
  $region6: #{conv_block_forward.3} parent=0 // loop_footer
    %s15 = sadd.s32 1, %s11
  $region7: #{conv_block_forward.3} parent=0 // loop_footer_branch
    %10 = sbr.rel target = $region3
  $region8: #{conv_block_forward.3} parent=0 // loop_exit
    _

// kernel: tile.28
$region0: #{tile.28}
  #allocation0 [shape = 's32[1]{0}', space=sflag, size = 0x4, scoped, tag = 'scoped memory for tile.28']
  %s0 = inlined_call_operand.vmem [shape: f32[8], index: 0, kind: input, shape index: {}]
  %s1 = inlined_call_operand.vmem [shape: f32[16,8], index: 1, kind: output, shape index: {}]
  // Predicated region
  $region2: #{tile.28} parent=0 // pred_check
    _
  $region3: #{tile.28} parent=0 // pred_check_branch
    %3 = sbr.rel (0) target = $region5
  $region4: #{tile.28} parent=0 // pred_region
    _
  $region5: #{tile.28} parent=0 // pred_fallthru
    _
  %v4 = vld [vmem:[%s0] ss:$0 sm:$0xff]
  %5 = vst [vmem:[%s1] sm:$0xff] %v4
  %s6 = scalar_lea.vmem %s1, 8
  %7 = vst [vmem:[%s6] sm:$0xff] %v4

// kernel: tile.29
$region0: #{tile.29}
  %s0 = inlined_call_operand.vmem [shape: f32[16,8], index: 0, kind: input, shape index: {}]
  %s1 = inlined_call_operand.vmem [shape: f32[1,1,128], index: 1, kind: output, shape index: {}]
  $region1: #{tile.29} parent=0
    #allocation0 [shape = 'u8[4096]{0}', space=vmem, size = 0x1000, scoped, tag = 'scoped mem for output reshape']
    %v2 = vld [vmem:[%s0] sm:$0x1]
    %vm3 = vcmask 64512
    %4 = vst.msk [vmem:[#allocation0] sm:$0x1] %vm3, %v2
    %s5 = scalar_lea.vmem %s0, 15
    %v6 = vld [vmem:[%s5] sm:$0x1]
    %7 = vrot.lane.b32.xlu0 %v6, 120
    %v8 = vpop.permute.xlu0 %7
    %vm9 = vcmask 1048512
    %10 = vst.msk [vmem:[#allocation0] sm:$0x1] %vm9, %v8
    %s11 = scalar_lea.vmem %s0, 14
    %v12 = vld [vmem:[%s11] sm:$0x1]
    %13 = vrot.lane.b32.xlu0 %v12, 112
    %v14 = vpop.permute.xlu0 %13
    %vm15 = vcmask 982912
    %16 = vst.msk [vmem:[#allocation0] sm:$0x1] %vm15, %v14
    %s17 = scalar_lea.vmem %s0, 13
    %v18 = vld [vmem:[%s17] sm:$0x1]
    %19 = vrot.lane.b32.xlu0 %v18, 104
    %v20 = vpop.permute.xlu0 %19
    %vm21 = vcmask 917312
    %22 = vst.msk [vmem:[#allocation0] sm:$0x1] %vm21, %v20
    %s23 = scalar_lea.vmem %s0, 12
    %v24 = vld [vmem:[%s23] sm:$0x1]
    %25 = vrot.lane.b32.xlu0 %v24, 96
    %v26 = vpop.permute.xlu0 %25
    %vm27 = vcmask 851712
    %28 = vst.msk [vmem:[#allocation0] sm:$0x1] %vm27, %v26
    %s29 = scalar_lea.vmem %s0, 11
    %v30 = vld [vmem:[%s29] sm:$0x1]
    %31 = vrot.lane.b32.xlu0 %v30, 88
    %v32 = vpop.permute.xlu0 %31
    %vm33 = vcmask 786112
    %34 = vst.msk [vmem:[#allocation0] sm:$0x1] %vm33, %v32
    %s35 = scalar_lea.vmem %s0, 10
    %v36 = vld [vmem:[%s35] sm:$0x1]
    %37 = vrot.lane.b32.xlu0 %v36, 80
    %v38 = vpop.permute.xlu0 %37
    %vm39 = vcmask 720512
    %40 = vst.msk [vmem:[#allocation0] sm:$0x1] %vm39, %v38
    %s41 = scalar_lea.vmem %s0, 9
    %v42 = vld [vmem:[%s41] sm:$0x1]
    %43 = vrot.lane.b32.xlu0 %v42, 72
    %v44 = vpop.permute.xlu0 %43
    %vm45 = vcmask 654912
    %46 = vst.msk [vmem:[#allocation0] sm:$0x1] %vm45, %v44
    %s47 = scalar_lea.vmem %s0, 8
    %v48 = vld [vmem:[%s47] sm:$0x1]
    %49 = vrot.lane.b32.xlu0 %v48, 64
    %v50 = vpop.permute.xlu0 %49
    %vm51 = vcmask 589312
    %52 = vst.msk [vmem:[#allocation0] sm:$0x1] %vm51, %v50
    %s53 = scalar_lea.vmem %s0, 7
    %v54 = vld [vmem:[%s53] sm:$0x1]
    %55 = vrot.lane.b32.xlu0 %v54, 56
    %v56 = vpop.permute.xlu0 %55
    %vm57 = vcmask 523712
    %58 = vst.msk [vmem:[#allocation0] sm:$0x1] %vm57, %v56
    %s59 = scalar_lea.vmem %s0, 6
    %v60 = vld [vmem:[%s59] sm:$0x1]
    %61 = vrot.lane.b32.xlu0 %v60, 48
    %v62 = vpop.permute.xlu0 %61
    %vm63 = vcmask 458112
    %64 = vst.msk [vmem:[#allocation0] sm:$0x1] %vm63, %v62
    %s65 = scalar_lea.vmem %s0, 5
    %v66 = vld [vmem:[%s65] sm:$0x1]
    %67 = vrot.lane.b32.xlu0 %v66, 40
    %v68 = vpop.permute.xlu0 %67
    %vm69 = vcmask 392512
    %70 = vst.msk [vmem:[#allocation0] sm:$0x1] %vm69, %v68
    %s71 = scalar_lea.vmem %s0, 4
    %v72 = vld [vmem:[%s71] sm:$0x1]
    %73 = vrot.lane.b32.xlu0 %v72, 32
    %v74 = vpop.permute.xlu0 %73
    %vm75 = vcmask 326912
    %76 = vst.msk [vmem:[#allocation0] sm:$0x1] %vm75, %v74
    %s77 = scalar_lea.vmem %s0, 3
    %v78 = vld [vmem:[%s77] sm:$0x1]
    %79 = vrot.lane.b32.xlu0 %v78, 24
    %v80 = vpop.permute.xlu0 %79
    %vm81 = vcmask 261312
    %82 = vst.msk [vmem:[#allocation0] sm:$0x1] %vm81, %v80
    %s83 = scalar_lea.vmem %s0, 2
    %v84 = vld [vmem:[%s83] sm:$0x1]
    %85 = vrot.lane.b32.xlu0 %v84, 16
    %v86 = vpop.permute.xlu0 %85
    %vm87 = vcmask 195712
    %88 = vst.msk [vmem:[#allocation0] sm:$0x1] %vm87, %v86
    %s89 = scalar_lea.vmem %s0, 1
    %v90 = vld [vmem:[%s89] sm:$0x1]
    %91 = vrot.lane.b32.xlu0 %v90, 8
    %v92 = vpop.permute.xlu0 %91
    %vm93 = vcmask 130112
    %94 = vst.msk [vmem:[#allocation0] sm:$0x1] %vm93, %v92
    %s96 = sshll.u32 1, 1
    %s97 = ssub.s32 %s96, 1
    %v99 = vld [vmem:[#allocation0] sm:%s97]
    %s100 = sshll.u32 1, 1
    %s101 = ssub.s32 %s100, 1
    %102 = vst [vmem:[%s1] sm:%s101] %v99

// kernel: conv_block_forward.4
$region0: #{conv_block_forward.4}
  #allocation0 [shape = 'u32[]', space=smem, size = 0x4, offset = 0x4, fixed_abs, tag = 'smem constant byte address 0x4 - core index']
  #allocation1 [shape = 'u32[144,128]{1,0:T(1,128)}', space=vmem, size = 0x12000, scoped, tag = 'internal scratch']
  %s0 = inlined_call_operand.vmem [shape: f32[2,16,128], index: 0, kind: input, shape index: {}]
  %s1 = inlined_call_operand.vmem [shape: f32[1,1,128], index: 1, kind: input, shape index: {}]
  %s2 = inlined_call_operand.vmem [shape: f32[1,1,128], index: 2, kind: input, shape index: {}]
  %s3 = inlined_call_operand.vmem [shape: bf16[128,384], index: 3, kind: input, shape index: {}]
  %s4 = inlined_call_operand.vmem [shape: f32[2,16,128], index: 4, kind: output, shape index: {0}]
  %s5 = inlined_call_operand.vmem [shape: f32[2,1,128], index: 5, kind: output, shape index: {1}]
  %s6 = inlined_call_operand.vmem [shape: f32[2,1,128], index: 6, kind: output, shape index: {2}]
  %7 = xla_tuple %s4, %s5, %s6
  %s8 = sld [smem:[#allocation0]]
  $region65: #{conv_block_forward.4} parent=0
    _
  %s10 = ssub.s32 1, %s8
  %s11 = scalar_select 0, %s10, %s8
  loop: start=0, step=1, limit=4
  $region2: #{conv_block_forward.4} parent=0 // loop_pre_header
    _
  $region3: #{conv_block_forward.4} parent=0 // loop_header
    %s13 = sphi 0, %s17
    %p14 = scmp.ge.s32.totalorder %s13, 4
    %s23 = sphi 0, %s25
    %s26 = sphi 0, %s23
    %s27 = sphi 0, %s26
    %s43 = sphi 0, %s27
    %s47 = sphi 0, %s47
    %s49 = sphi 0, %s47
    %s50 = sphi 0, %s49
    %s64 = sphi 0, %s50
    %s68 = sphi 0, %s68
    %s70 = sphi 0, %s68
    %s71 = sphi 0, %s70
    %s85 = sphi 0, %s71
    %s89 = sphi 0, %s89
    %s91 = sphi 0, %s89
    %s92 = sphi 0, %s91
    %s106 = sphi 0, %s92
    %s112 = sphi 0, %s114
    %s115 = sphi 0, %s112
    %s116 = sphi 0, %s115
    %s132 = sphi 0, %s116
    %s138 = sphi 0, %s140
    %s141 = sphi 0, %s138
    %s142 = sphi 0, %s141
    %s158 = sphi 0, %s142
    %s164 = sphi 0, %s166
    %s167 = sphi 0, %s164
    %s168 = sphi 0, %s167
    %s184 = sphi 0, %s168
  $region4: #{conv_block_forward.4} parent=0 // loop_header_branch
    %16 = sbr.rel (%p14) target = $region8
  $region5: #{conv_block_forward.4} parent=0 // loop_body
    %s18 = ssub.s32 %s13, 1
    %s19 = ssub.s32 %s13, 2
    %s20 = sadd.s32 %s13, 1
    %s21 = ssub.s32 %s13, %s20
    %p22 = scmp.eq.s32.totalorder %s21, 0
    %s24 = sadd.s32 %s23, 1
    %s25 = scalar_select %p22, %s23, %s24
    %p28 = pneg %p22
    %p29 = scmp.eq.s32.totalorder %s13, 1
    %p30 = por %p28, %p29
    %p31 = scmp.ne.s32.totalorder %s23, %s26
    %p32 = scmp.eq.s32.totalorder %s13, 0
    %p33 = por %p31, %p32
    %p34 = scmp.ne.s32.totalorder %s23, %s26
    %p35 = scmp.eq.s32.totalorder %s18, 1
    %p36 = por %p34, %p35
    %p37 = scmp.ne.s32.totalorder %s26, %s27
    %p38 = scmp.eq.s32.totalorder %s18, 0
    %p39 = por %p37, %p38
    %p40 = scmp.ne.s32.totalorder %s26, %s27
    %p41 = scmp.eq.s32.totalorder %s19, 1
    %p42 = por %p40, %p41
    %p44 = scmp.ne.s32.totalorder %s27, %s43
    %p45 = scmp.eq.s32.totalorder %s19, 0
    %p46 = por %p44, %p45
    %s48 = sadd.s32 %s47, 1
    %p51 = scmp.eq.s32.totalorder %s13, 1
    %p52 = scmp.ne.s32.totalorder %s47, %s49
    %p53 = scmp.eq.s32.totalorder %s13, 0
    %p54 = por %p52, %p53
    %p55 = scmp.ne.s32.totalorder %s47, %s49
    %p56 = scmp.eq.s32.totalorder %s18, 1
    %p57 = por %p55, %p56
    %p58 = scmp.ne.s32.totalorder %s49, %s50
    %p59 = scmp.eq.s32.totalorder %s18, 0
    %p60 = por %p58, %p59
    %p61 = scmp.ne.s32.totalorder %s49, %s50
    %p62 = scmp.eq.s32.totalorder %s19, 1
    %p63 = por %p61, %p62
    %p65 = scmp.ne.s32.totalorder %s50, %s64
    %p66 = scmp.eq.s32.totalorder %s19, 0
    %p67 = por %p65, %p66
    %s69 = sadd.s32 %s68, 1
    %p72 = scmp.eq.s32.totalorder %s13, 1
    %p73 = scmp.ne.s32.totalorder %s68, %s70
    %p74 = scmp.eq.s32.totalorder %s13, 0
    %p75 = por %p73, %p74
    %p76 = scmp.ne.s32.totalorder %s68, %s70
    %p77 = scmp.eq.s32.totalorder %s18, 1
    %p78 = por %p76, %p77
    %p79 = scmp.ne.s32.totalorder %s70, %s71
    %p80 = scmp.eq.s32.totalorder %s18, 0
    %p81 = por %p79, %p80
    %p82 = scmp.ne.s32.totalorder %s70, %s71
    %p83 = scmp.eq.s32.totalorder %s19, 1
    %p84 = por %p82, %p83
    %p86 = scmp.ne.s32.totalorder %s71, %s85
    %p87 = scmp.eq.s32.totalorder %s19, 0
    %p88 = por %p86, %p87
    %s90 = sadd.s32 %s89, 1
    %p93 = scmp.eq.s32.totalorder %s13, 1
    %p94 = scmp.ne.s32.totalorder %s89, %s91
    %p95 = scmp.eq.s32.totalorder %s13, 0
    %p96 = por %p94, %p95
    %p97 = scmp.ne.s32.totalorder %s89, %s91
    %p98 = scmp.eq.s32.totalorder %s18, 1
    %p99 = por %p97, %p98
    %p100 = scmp.ne.s32.totalorder %s91, %s92
    %p101 = scmp.eq.s32.totalorder %s18, 0
    %p102 = por %p100, %p101
    %p103 = scmp.ne.s32.totalorder %s91, %s92
    %p104 = scmp.eq.s32.totalorder %s19, 1
    %p105 = por %p103, %p104
    %p107 = scmp.ne.s32.totalorder %s92, %s106
    %p108 = scmp.eq.s32.totalorder %s19, 0
    %p109 = por %p107, %p108
    %s110 = ssub.s32 %s13, %s20
    %p111 = scmp.eq.s32.totalorder %s110, 0
    %s113 = sadd.s32 %s112, 1
    %s114 = scalar_select %p111, %s112, %s113
    %p117 = pneg %p111
    %p118 = scmp.eq.s32.totalorder %s13, 1
    %p119 = por %p117, %p118
    %p120 = scmp.ne.s32.totalorder %s112, %s115
    %p121 = scmp.eq.s32.totalorder %s13, 0
    %p122 = por %p120, %p121
    %p123 = scmp.ne.s32.totalorder %s112, %s115
    %p124 = scmp.eq.s32.totalorder %s18, 1
    %p125 = por %p123, %p124
    %p126 = scmp.ne.s32.totalorder %s115, %s116
    %p127 = scmp.eq.s32.totalorder %s18, 0
    %p128 = por %p126, %p127
    %p129 = scmp.ne.s32.totalorder %s115, %s116
    %p130 = scmp.eq.s32.totalorder %s19, 1
    %p131 = por %p129, %p130
    %p133 = scmp.ne.s32.totalorder %s116, %s132
    %p134 = scmp.eq.s32.totalorder %s19, 0
    %p135 = por %p133, %p134
    %s136 = ssub.s32 %s13, %s20
    %p137 = scmp.eq.s32.totalorder %s136, 0
    %s139 = sadd.s32 %s138, 1
    %s140 = scalar_select %p137, %s138, %s139
    %p143 = pneg %p137
    %p144 = scmp.eq.s32.totalorder %s13, 1
    %p145 = por %p143, %p144
    %p146 = scmp.ne.s32.totalorder %s138, %s141
    %p147 = scmp.eq.s32.totalorder %s13, 0
    %p148 = por %p146, %p147
    %p149 = scmp.ne.s32.totalorder %s138, %s141
    %p150 = scmp.eq.s32.totalorder %s18, 1
    %p151 = por %p149, %p150
    %p152 = scmp.ne.s32.totalorder %s141, %s142
    %p153 = scmp.eq.s32.totalorder %s18, 0
    %p154 = por %p152, %p153
    %p155 = scmp.ne.s32.totalorder %s141, %s142
    %p156 = scmp.eq.s32.totalorder %s19, 1
    %p157 = por %p155, %p156
    %p159 = scmp.ne.s32.totalorder %s142, %s158
    %p160 = scmp.eq.s32.totalorder %s19, 0
    %p161 = por %p159, %p160
    %s162 = ssub.s32 %s13, %s20
    %p163 = scmp.eq.s32.totalorder %s162, 0
    %s165 = sadd.s32 %s164, 1
    %s166 = scalar_select %p163, %s164, %s165
    %p169 = pneg %p163
    %p170 = scmp.eq.s32.totalorder %s13, 1
    %p171 = por %p169, %p170
    %p172 = scmp.ne.s32.totalorder %s164, %s167
    %p173 = scmp.eq.s32.totalorder %s13, 0
    %p174 = por %p172, %p173
    %p175 = scmp.ne.s32.totalorder %s164, %s167
    %p176 = scmp.eq.s32.totalorder %s18, 1
    %p177 = por %p175, %p176
    %p178 = scmp.ne.s32.totalorder %s167, %s168
    %p179 = scmp.eq.s32.totalorder %s18, 0
    %p180 = por %p178, %p179
    %p181 = scmp.ne.s32.totalorder %s167, %s168
    %p182 = scmp.eq.s32.totalorder %s19, 1
    %p183 = por %p181, %p182
    %p185 = scmp.ne.s32.totalorder %s168, %s184
    %p186 = scmp.eq.s32.totalorder %s19, 0
    %p187 = por %p185, %p186
    %p188 = scmp.le.s32.totalorder 1, %s13
    %p189 = scmp.lt.s32.totalorder %s13, 3
    %p190 = pnand %p188, %p189
    %p191 = pneg %p190
    // Predicated region
    $region9: #{conv_block_forward.4} parent=5 // pred_check
      _
    $region10: #{conv_block_forward.4} parent=5 // pred_check_branch
      %193 = sbr.rel (%p190) target = $region12
    $region11: #{conv_block_forward.4} parent=5 // pred_region
      %s194 = ssub.s32 %s13, 1
      // Predicated region
      $region13: #{conv_block_forward.4} parent=11 // pred_check
        %p195 = pneg %p60
      $region14: #{conv_block_forward.4} parent=11 // pred_check_branch
        %197 = sbr.rel (%p195) target = $region16
      $region15: #{conv_block_forward.4} parent=11 // pred_region
        _
      $region16: #{conv_block_forward.4} parent=11 // pred_fallthru
        _
      // Predicated region
      $region17: #{conv_block_forward.4} parent=11 // pred_check
        %p198 = pneg %p81
      $region18: #{conv_block_forward.4} parent=11 // pred_check_branch
        %200 = sbr.rel (%p198) target = $region20
      $region19: #{conv_block_forward.4} parent=11 // pred_region
        _
      $region20: #{conv_block_forward.4} parent=11 // pred_fallthru
        _
      // Predicated region
      $region21: #{conv_block_forward.4} parent=11 // pred_check
        %p201 = pneg %p102
      $region22: #{conv_block_forward.4} parent=11 // pred_check_branch
        %203 = sbr.rel (%p201) target = $region24
      $region23: #{conv_block_forward.4} parent=11 // pred_region
        _
      $region24: #{conv_block_forward.4} parent=11 // pred_fallthru
        _
    $region12: #{conv_block_forward.4} parent=5 // pred_fallthru
      _
    %p204 = scmp.lt.s32.totalorder %s13, 2
    // Predicated region
    $region25: #{conv_block_forward.4} parent=5 // pred_check
      %p205 = pneg %p204
    $region26: #{conv_block_forward.4} parent=5 // pred_check_branch
      %207 = sbr.rel (%p205) target = $region28
    $region27: #{conv_block_forward.4} parent=5 // pred_region
      // Predicated region
      $region29: #{conv_block_forward.4} parent=27 // pred_check
        %p208 = pneg %p33
      $region30: #{conv_block_forward.4} parent=27 // pred_check_branch
        %210 = sbr.rel (%p208) target = $region32
      $region31: #{conv_block_forward.4} parent=27 // pred_region
        %p211 = scmp.lt.s32.totalorder %s13, 1
        %s212 = scalar_select %p211, %s13, 1
        %s213 = smul.addr %s212, 2
        %s214 = smul.addr %s213, 8
        %s215 = scalar_lea.vmem %s0, %s214
      $region32: #{conv_block_forward.4} parent=27 // pred_fallthru
        _
    $region28: #{conv_block_forward.4} parent=5 // pred_fallthru
      _
    %p216 = scmp.le.s32.totalorder 1, %s13
    %p217 = scmp.lt.s32.totalorder %s13, 3
    %p218 = pnand %p216, %p217
    %p219 = pneg %p218
    // Predicated region
    $region33: #{conv_block_forward.4} parent=5 // pred_check
      _
    $region34: #{conv_block_forward.4} parent=5 // pred_check_branch
      %221 = sbr.rel (%p218) target = $region36
    $region35: #{conv_block_forward.4} parent=5 // pred_region
      %s222 = ssub.s32 %s13, 1
      %p223 = scmp.lt.s32.totalorder %s18, 1
      %s224 = scalar_select %p223, %s18, 1
      %s225 = smul.addr %s224, 2
      %s226 = smul.addr %s225, 8
      %s227 = scalar_lea.vmem %s0, %s226
      %p228 = pneg %p39
      %p229 = pneg %p36
      %p230 = pneg %p60
      %p231 = pneg %p57
      %p232 = pneg %p81
      %p233 = pneg %p78
      %p234 = pneg %p102
      %p235 = pneg %p99
      %p236 = pneg %p128
      %p237 = pneg %p125
      %p238 = scmp.lt.s32.totalorder %s18, 1
      %s239 = scalar_select %p238, %s18, 1
      %s240 = smul.addr %s239, 2
      %s241 = smul.addr %s240, 8
      %s242 = scalar_lea.vmem %s4, %s241
      %p243 = pneg %p154
      %p244 = pneg %p151
      %p245 = scmp.lt.s32.totalorder %s18, 1
      %s246 = scalar_select %p245, %s18, 1
      %s247 = scalar_lea.vmem %s5, %s246
      %p248 = pneg %p180
      %p249 = pneg %p177
      %p250 = scmp.lt.s32.totalorder %s18, 1
      %s251 = scalar_select %p250, %s18, 1
      %s252 = scalar_lea.vmem %s6, %s251
      %p253 = scmp.lt.s32.totalorder %s18, 1
      %s254 = scalar_select %p253, %s18, 1
      %s255 = smul.addr %s254, 2
      %s256 = smul.addr %s255, 8
      %s257 = scalar_lea.vmem %s0, %s256
      %p258 = scmp.lt.s32.totalorder %s18, 1
      %s259 = scalar_select %p258, %s18, 1
      %s260 = smul.addr %s259, 2
      %s261 = smul.addr %s260, 8
      %s262 = scalar_lea.vmem %s4, %s261
      %p263 = scmp.lt.s32.totalorder %s18, 1
      %s264 = scalar_select %p263, %s18, 1
      %s265 = scalar_lea.vmem %s5, %s264
      %p266 = scmp.lt.s32.totalorder %s18, 1
      %s267 = scalar_select %p266, %s18, 1
      %s268 = scalar_lea.vmem %s6, %s267
      %v270 = vld [vmem:[%s257] sm:$0xff]
      %v271 = vld [vmem:[%s257 + $0x8] sm:$0xff]
      %v272 = vld [vmem:[%s1] sm:$0x1]
      %v274 = vlaneseq
      %v275 = vshrl.u32 %v274, 7
      %v276 = vsub.s32 0, %v275
      %v277 = vrot.slane %v272, %v276
      %v279 = vmul.f32 %v270, %v277
      %v280 = vmul.f32 %v271, %v277
      %v281 = vld [vmem:[%s2] sm:$0x1]
      %v283 = vlaneseq
      %v284 = vshrl.u32 %v283, 7
      %v285 = vsub.s32 0, %v284
      %v286 = vrot.slane %v281, %v285
      %v288 = vadd.f32 %v279, %v286
      %v289 = vadd.f32 %v280, %v286
      %vm290 = vcmp.ge.f32.partialorder %v288, 0.0
      %vm291 = vcmp.ge.f32.partialorder %v289, 0.0
      %v292 = vmul.f32 %v288, 0.01
      %v293 = vmul.f32 %v289, 0.01
      %v294 = vsel %vm290, %v288, %v292
      %v295 = vsel %vm291, %v289, %v293
      %v296 = vpack.c.bf16 %v294, 0.0
      %v297 = vpack.c.bf16 0.0, %v295
      %v298 = vpack.c.bf16 0.0, 0.0
      %v299 = vld [vmem:[%s3] sm:$0xff]
      %v300 = vld [vmem:[%s3 + $0x8] sm:$0xf]
      %v301 = vld [vmem:[%s3 + $0xc] sm:$0xff]
      %v302 = vld [vmem:[%s3 + $0x14] sm:$0xf]
      %v303 = vld [vmem:[%s3 + $0x18] sm:$0xff]
      %v304 = vld [vmem:[%s3 + $0x20] sm:$0xf]
      %v305 = vld [vmem:[%s3 + $0x24] sm:$0xff]
      %v306 = vld [vmem:[%s3 + $0x2c] sm:$0xf]
      %v307 = vld [vmem:[%s3 + $0x30] sm:$0xff]
      %v308 = vld [vmem:[%s3 + $0x38] sm:$0xf]
      %v309 = vld [vmem:[%s3 + $0x3c] sm:$0xff]
      %v310 = vld [vmem:[%s3 + $0x44] sm:$0xf]
      %v311 = vld [vmem:[%s3 + $0x48] sm:$0xff]
      %v312 = vld [vmem:[%s3 + $0x50] sm:$0xf]
      %v313 = vld [vmem:[%s3 + $0x54] sm:$0xff]
      %v314 = vld [vmem:[%s3 + $0x5c] sm:$0xf]
      %v315 = vld [vmem:[%s3 + $0x60] sm:$0xff]
      %v316 = vld [vmem:[%s3 + $0x68] sm:$0xf]
      %v317 = vld [vmem:[%s3 + $0x6c] sm:$0xff]
      %v318 = vld [vmem:[%s3 + $0x74] sm:$0xf]
      %v319 = vld [vmem:[%s3 + $0x78] sm:$0xff]
      %v320 = vld [vmem:[%s3 + $0x80] sm:$0xf]
      %v321 = vld [vmem:[%s3 + $0x84] sm:$0xff]
      %v322 = vld [vmem:[%s3 + $0x8c] sm:$0xf]
      %v323 = vld [vmem:[%s3 + $0x90] sm:$0xff]
      %v324 = vld [vmem:[%s3 + $0x98] sm:$0xf]
      %v325 = vld [vmem:[%s3 + $0x9c] sm:$0xff]
      %v326 = vld [vmem:[%s3 + $0xa4] sm:$0xf]
      %v327 = vld [vmem:[%s3 + $0xa8] sm:$0xff]
      %v328 = vld [vmem:[%s3 + $0xb0] sm:$0xf]
      %v329 = vld [vmem:[%s3 + $0xb4] sm:$0xff]
      %v330 = vld [vmem:[%s3 + $0xbc] sm:$0xf]
      %vm331 = vsmask.f32 4352
      %v333 = vshrl.u32 %v296, 16
      %v335 = vrot.slane %v333, 3
      %v336 = vshll.u32 %v296, 16
      %v338 = vrot.slane %v336, 4
      %v339 = vor.u32 %v335, %v338
      %v341 = vshrl.u32 %v297, 16
      %v343 = vrot.slane %v341, 3
      %v344 = vshll.u32 %v297, 16
      %v346 = vrot.slane %v344, 4
      %v347 = vor.u32 %v343, %v346
      %v348 = vsel %vm331, %v339, %v347
      %v350 = vshrl.u32 %v298, 16
      %v352 = vrot.slane %v350, 3
      %v353 = vshll.u32 %v298, 16
      %v355 = vrot.slane %v353, 4
      %v356 = vor.u32 %v352, %v355
      %v357 = vsel %vm331, %v347, %v356
      %v392 = vunpack.c.l.b16 %v299
      %v393 = vunpack.c.h.b16 %v299
      %v394 = vunpack.c.l.b16 %v300
      %v395 = vunpack.c.l.b16 %v301
      %v396 = vunpack.c.h.b16 %v301
      %v397 = vunpack.c.l.b16 %v302
      %v398 = vunpack.c.l.b16 %v303
      %v399 = vunpack.c.h.b16 %v303
      %v400 = vunpack.c.l.b16 %v304
      %v401 = vunpack.c.l.b16 %v305
      %v402 = vunpack.c.h.b16 %v305
      %v403 = vunpack.c.l.b16 %v306
      %v404 = vunpack.c.l.b16 %v307
      %v405 = vunpack.c.h.b16 %v307
      %v406 = vunpack.c.l.b16 %v308
      %v407 = vunpack.c.l.b16 %v309
      %v408 = vunpack.c.h.b16 %v309
      %v409 = vunpack.c.l.b16 %v310
      %v410 = vunpack.c.l.b16 %v311
      %v411 = vunpack.c.h.b16 %v311
      %v412 = vunpack.c.l.b16 %v312
      %v413 = vunpack.c.l.b16 %v313
      %v414 = vunpack.c.h.b16 %v313
      %v415 = vunpack.c.l.b16 %v314
      %v416 = vunpack.c.l.b16 %v315
      %v417 = vunpack.c.h.b16 %v315
      %v418 = vunpack.c.l.b16 %v316
      %v419 = vunpack.c.l.b16 %v317
      %v420 = vunpack.c.h.b16 %v317
      %v421 = vunpack.c.l.b16 %v318
      %v422 = vunpack.c.l.b16 %v319
      %v423 = vunpack.c.h.b16 %v319
      %v424 = vunpack.c.l.b16 %v320
      %v425 = vunpack.c.l.b16 %v321
      %v426 = vunpack.c.h.b16 %v321
      %v427 = vunpack.c.l.b16 %v322
      %v428 = vunpack.c.l.b16 %v323
      %v429 = vunpack.c.h.b16 %v323
      %v430 = vunpack.c.l.b16 %v324
      %v431 = vunpack.c.l.b16 %v325
      %v432 = vunpack.c.h.b16 %v325
      %v433 = vunpack.c.l.b16 %v326
      %v434 = vunpack.c.l.b16 %v327
      %v435 = vunpack.c.h.b16 %v327
      %v436 = vunpack.c.l.b16 %v328
      %v437 = vunpack.c.l.b16 %v329
      %v438 = vunpack.c.h.b16 %v329
      %v439 = vunpack.c.l.b16 %v330
      %v440 = vpack.c.b16 %v395, %v392
      %v441 = vpack.c.b16 %v396, %v393
      %v442 = vpack.c.b16 %v397, %v394
      %v443 = vpack.c.b16 %v401, %v398
      %v444 = vpack.c.b16 %v402, %v399
      %v445 = vpack.c.b16 %v403, %v400
      %v446 = vpack.c.b16 %v407, %v404
      %v447 = vpack.c.b16 %v408, %v405
      %v448 = vpack.c.b16 %v409, %v406
      %v449 = vpack.c.b16 %v413, %v410
      %v450 = vpack.c.b16 %v414, %v411
      %v451 = vpack.c.b16 %v415, %v412
      %v452 = vpack.c.b16 %v419, %v416
      %v453 = vpack.c.b16 %v420, %v417
      %v454 = vpack.c.b16 %v421, %v418
      %v455 = vpack.c.b16 %v425, %v422
      %v456 = vpack.c.b16 %v426, %v423
      %v457 = vpack.c.b16 %v427, %v424
      %v458 = vpack.c.b16 %v431, %v428
      %v459 = vpack.c.b16 %v432, %v429
      %v460 = vpack.c.b16 %v433, %v430
      %v461 = vpack.c.b16 %v437, %v434
      %v462 = vpack.c.b16 %v438, %v435
      %v463 = vpack.c.b16 %v439, %v436
      %488 = vmatprep.subr.bf16.mxu0 %v462
      %489 = vmatpush1.bf16.msra.mxu0 %v461
      %490 = vmatprep.subr.bf16.mxu0 %v459
      %491 = vmatpush1.bf16.msra.mxu0 %v458
      %492 = vmatprep.subr.bf16.mxu0 %v456
      %493 = vmatpush1.bf16.msra.mxu0 %v455
      %494 = vmatprep.subr.bf16.mxu0 %v453
      %495 = vmatpush1.bf16.msra.mxu0 %v452
      %496 = vmatprep.subr.bf16.mxu0 %v450
      %497 = vmatpush1.bf16.msra.mxu0 %v449
      %498 = vmatprep.subr.bf16.mxu0 %v447
      %499 = vmatpush1.bf16.msra.mxu0 %v446
      %500 = vmatprep.subr.bf16.mxu0 %v444
      %501 = vmatpush1.bf16.msra.mxu0 %v443
      %502 = vmatprep.subr.bf16.mxu0 %v441
      %503 = vmatpush1.bf16.msra.mxu0 %v440
      %504 = vmatprep.subr.bf16.mxu0 0
      %505 = vmatpush2.bf16.msra.mxu0 0
      %506 = vmatprep.subr.bf16.mxu0 0
      %507 = vmatpush2.bf16.msra.mxu0 0
      %508 = vmatprep.subr.bf16.mxu0 0
      %509 = vmatpush2.bf16.msra.mxu0 0
      %510 = vmatprep.subr.bf16.mxu0 0
      %511 = vmatpush2.bf16.msra.mxu0 0
      %512 = vmatprep.subr.bf16.mxu0 0
      %513 = vmatpush2.bf16.msra.mxu0 0
      %514 = vmatprep.subr.bf16.mxu0 0
      %515 = vmatpush2.bf16.msra.mxu0 0
      %516 = vmatprep.subr.bf16.mxu0 0
      %517 = vmatpush2.bf16.msra.mxu0 0
      %518 = vmatprep.subr.bf16.mxu0 0
      %519 = vmatpush2.bf16.msra.mxu0 0
      %520 = vmatprep.mubr.bf16.mxu0 0
      %521 = vmatmul.mubr.bf16.gmra.mxu0 %v348
      %v522 = vpop.f32.mrf.mxu0
      %v523 = vadd.f32 0.0, %v522
      %v524 = vpop.f32.mrf.mxu0
      %v525 = vadd.f32 0.0, %v524
      %v526 = vpop.f32.mrf.mxu0
      %v527 = vadd.f32 0.0, %v526
      %v528 = vpop.f32.mrf.mxu0
      %v529 = vadd.f32 0.0, %v528
      %530 = vmatprep.mubr.bf16.mxu0 0
      %531 = vmatmul.mubr.bf16.gmra.mxu0 %v357
      %v532 = vpop.f32.mrf.mxu0
      %v533 = vpop.f32.mrf.mxu0
      %v534 = vadd.f32 0.0, %v533
      %v535 = vpop.f32.mrf.mxu0
      %v536 = vpop.f32.mrf.mxu0
      %537 = vdwg.mxu0
      %538 = vmatprep.subr.bf16.mxu0 0
      %539 = vmatpush1.bf16.msra.mxu0 %v463
      %540 = vmatprep.subr.bf16.mxu0 0
      %541 = vmatpush1.bf16.msra.mxu0 %v460
      %542 = vmatprep.subr.bf16.mxu0 0
      %543 = vmatpush1.bf16.msra.mxu0 %v457
      %544 = vmatprep.subr.bf16.mxu0 0
      %545 = vmatpush1.bf16.msra.mxu0 %v454
      %546 = vmatprep.subr.bf16.mxu0 0
      %547 = vmatpush1.bf16.msra.mxu0 %v451
      %548 = vmatprep.subr.bf16.mxu0 0
      %549 = vmatpush1.bf16.msra.mxu0 %v448
      %550 = vmatprep.subr.bf16.mxu0 0
      %551 = vmatpush1.bf16.msra.mxu0 %v445
      %552 = vmatprep.subr.bf16.mxu0 0
      %553 = vmatpush1.bf16.msra.mxu0 %v442
      %554 = vmatprep.subr.bf16.mxu0 0
      %555 = vmatpush2.bf16.msra.mxu0 0
      %556 = vmatprep.subr.bf16.mxu0 0
      %557 = vmatpush2.bf16.msra.mxu0 0
      %558 = vmatprep.subr.bf16.mxu0 0
      %559 = vmatpush2.bf16.msra.mxu0 0
      %560 = vmatprep.subr.bf16.mxu0 0
      %561 = vmatpush2.bf16.msra.mxu0 0
      %562 = vmatprep.subr.bf16.mxu0 0
      %563 = vmatpush2.bf16.msra.mxu0 0
      %564 = vmatprep.subr.bf16.mxu0 0
      %565 = vmatpush2.bf16.msra.mxu0 0
      %566 = vmatprep.subr.bf16.mxu0 0
      %567 = vmatpush2.bf16.msra.mxu0 0
      %568 = vmatprep.subr.bf16.mxu0 0
      %569 = vmatpush2.bf16.msra.mxu0 0
      %570 = vmatprep.mubr.bf16.mxu0 0
      %571 = vmatmul.mubr.bf16.gmra.mxu0 %v348
      %v572 = vpop.f32.mrf.mxu0
      %v573 = vadd.f32 0.0, %v572
      %v574 = vpop.f32.mrf.mxu0
      %v575 = vpop.f32.mrf.mxu0
      %v576 = vadd.f32 0.0, %v575
      %v577 = vpop.f32.mrf.mxu0
      %578 = vmatprep.mubr.bf16.mxu0 0
      %579 = vmatmul.mubr.bf16.gmra.mxu0 %v357
      %v580 = vpop.f32.mrf.mxu0
      %v581 = vadd.f32 0.0, %v580
      %v582 = vpop.f32.mrf.mxu0
      %v583 = vpop.f32.mrf.mxu0
      %v584 = vpop.f32.mrf.mxu0
      %585 = vdwg.mxu0
      %vm589 = vcmask 1046528
      %v590 = vrot.slane %v525, 1
      %v591 = vrot.slane %v529, 1
      %v592 = vsel %vm589, %v590, %v591
      %v593 = vrot.slane %v534, 1
      %v594 = vsel %vm589, %v591, %v593
      %v597 = vadd.f32 %v523, %v592
      %v598 = vadd.f32 %v527, %v594
      %vm602 = vcmask 1045504
      %v603 = vrot.slane %v573, 2
      %v604 = vrot.slane %v576, 2
      %v605 = vsel %vm602, %v603, %v604
      %v606 = vrot.slane %v581, 2
      %v607 = vsel %vm602, %v604, %v606
      %v610 = vadd.f32 %v597, %v605
      %v611 = vadd.f32 %v598, %v607
      %612 = vst [vmem:[%s262] sm:$0xff] %v610
      %613 = vst [vmem:[%s262 + $0x8] sm:$0xff] %v611
      %v614 = vadd.f32 %v610, %v611
      %v615 = vrot.slane %v614, 4
      %v616 = vadd.f32 %v614, %v615
      %v617 = vrot.slane %v616, 2
      %v618 = vadd.f32 %v616, %v617
      %v619 = vrot.slane %v618, 1
      %v620 = vadd.f32 %v618, %v619
      %621 = vst [vmem:[%s265] sm:$0x1] %v620
      %v622 = vmul.f32 %v610, %v610
      %v623 = vmul.f32 %v611, %v611
      %v624 = vadd.f32 %v622, %v623
      %v625 = vrot.slane %v624, 4
      %v626 = vadd.f32 %v624, %v625
      %v627 = vrot.slane %v626, 2
      %v628 = vadd.f32 %v626, %v627
      %v629 = vrot.slane %v628, 1
      %v630 = vadd.f32 %v628, %v629
      %631 = vst [vmem:[%s268] sm:$0x1] %v630
      %p632 = scmp.lt.s32.totalorder %s18, 1
      %s633 = scalar_select %p632, %s18, 1
      %s634 = smul.addr %s633, 2
      %s635 = smul.addr %s634, 8
      %s636 = scalar_lea.vmem %s4, %s635
      %p637 = scmp.lt.s32.totalorder %s18, 1
      %s638 = scalar_select %p637, %s18, 1
      %s639 = scalar_lea.vmem %s5, %s638
      %p640 = scmp.lt.s32.totalorder %s18, 1
      %s641 = scalar_select %p640, %s18, 1
      %s642 = scalar_lea.vmem %s6, %s641
      // Predicated region
      $region37: #{conv_block_forward.4} parent=35 // pred_check
        %p643 = pneg %p125
      $region38: #{conv_block_forward.4} parent=35 // pred_check_branch
        %645 = sbr.rel (%p643) target = $region40
      $region39: #{conv_block_forward.4} parent=35 // pred_region
        _
      $region40: #{conv_block_forward.4} parent=35 // pred_fallthru
        _
      // Predicated region
      $region41: #{conv_block_forward.4} parent=35 // pred_check
        %p646 = pneg %p151
      $region42: #{conv_block_forward.4} parent=35 // pred_check_branch
        %648 = sbr.rel (%p646) target = $region44
      $region43: #{conv_block_forward.4} parent=35 // pred_region
        _
      $region44: #{conv_block_forward.4} parent=35 // pred_fallthru
        _
      // Predicated region
      $region45: #{conv_block_forward.4} parent=35 // pred_check
        %p649 = pneg %p177
      $region46: #{conv_block_forward.4} parent=35 // pred_check_branch
        %651 = sbr.rel (%p649) target = $region48
      $region47: #{conv_block_forward.4} parent=35 // pred_region
        _
      $region48: #{conv_block_forward.4} parent=35 // pred_fallthru
        _
    $region36: #{conv_block_forward.4} parent=5 // pred_fallthru
      _
    %p652 = scmp.le.s32.totalorder 2, %s13
    // Predicated region
    $region49: #{conv_block_forward.4} parent=5 // pred_check
      %p653 = pneg %p652
    $region50: #{conv_block_forward.4} parent=5 // pred_check_branch
      %655 = sbr.rel (%p653) target = $region52
    $region51: #{conv_block_forward.4} parent=5 // pred_region
      %s656 = ssub.s32 %s13, 2
      // Predicated region
      $region53: #{conv_block_forward.4} parent=51 // pred_check
        %p657 = pneg %p131
      $region54: #{conv_block_forward.4} parent=51 // pred_check_branch
        %659 = sbr.rel (%p657) target = $region56
      $region55: #{conv_block_forward.4} parent=51 // pred_region
        %p660 = scmp.lt.s32.totalorder %s19, 1
        %s661 = scalar_select %p660, %s19, 1
        %s662 = smul.addr %s661, 2
        %s663 = smul.addr %s662, 8
        %s664 = scalar_lea.vmem %s4, %s663
      $region56: #{conv_block_forward.4} parent=51 // pred_fallthru
        _
      // Predicated region
      $region57: #{conv_block_forward.4} parent=51 // pred_check
        %p665 = pneg %p157
      $region58: #{conv_block_forward.4} parent=51 // pred_check_branch
        %667 = sbr.rel (%p665) target = $region60
      $region59: #{conv_block_forward.4} parent=51 // pred_region
        %p668 = scmp.lt.s32.totalorder %s19, 1
        %s669 = scalar_select %p668, %s19, 1
        %s670 = scalar_lea.vmem %s5, %s669
      $region60: #{conv_block_forward.4} parent=51 // pred_fallthru
        _
      // Predicated region
      $region61: #{conv_block_forward.4} parent=51 // pred_check
        %p671 = pneg %p183
      $region62: #{conv_block_forward.4} parent=51 // pred_check_branch
        %673 = sbr.rel (%p671) target = $region64
      $region63: #{conv_block_forward.4} parent=51 // pred_region
        %p674 = scmp.lt.s32.totalorder %s19, 1
        %s675 = scalar_select %p674, %s19, 1
        %s676 = scalar_lea.vmem %s6, %s675
      $region64: #{conv_block_forward.4} parent=51 // pred_fallthru
        _
    $region52: #{conv_block_forward.4} parent=5 // pred_fallthru
      _
  $region6: #{conv_block_forward.4} parent=0 // loop_footer
    %s17 = sadd.s32 1, %s13
  $region7: #{conv_block_forward.4} parent=0 // loop_footer_branch
    %12 = sbr.rel target = $region3
  $region8: #{conv_block_forward.4} parent=0 // loop_exit
    _

// kernel: conv_block_forward.5
$region0: #{conv_block_forward.5}
  #allocation0 [shape = 'u32[]', space=smem, size = 0x4, offset = 0x4, fixed_abs, tag = 'smem constant byte address 0x4 - core index']
  #allocation1 [shape = 'u32[144,128]{1,0:T(1,128)}', space=vmem, size = 0x12000, scoped, tag = 'internal scratch']
  %s0 = inlined_call_operand.vmem [shape: f32[2,16,128], index: 0, kind: input, shape index: {}]
  %s1 = inlined_call_operand.vmem [shape: f32[1,1,128], index: 1, kind: input, shape index: {}]
  %s2 = inlined_call_operand.vmem [shape: f32[1,1,128], index: 2, kind: input, shape index: {}]
  %s3 = inlined_call_operand.vmem [shape: f32[2,16,128], index: 3, kind: output, shape index: {}]
  %s4 = sld [smem:[#allocation0]]
  $region45: #{conv_block_forward.5} parent=0
    _
  %s6 = ssub.s32 1, %s4
  %s7 = scalar_select 0, %s6, %s4
  loop: start=0, step=1, limit=4
  $region2: #{conv_block_forward.5} parent=0 // loop_pre_header
    _
  $region3: #{conv_block_forward.5} parent=0 // loop_header
    %s9 = sphi 0, %s13
    %p10 = scmp.ge.s32.totalorder %s9, 4
    %s19 = sphi 0, %s21
    %s22 = sphi 0, %s19
    %s23 = sphi 0, %s22
    %s39 = sphi 0, %s23
    %s43 = sphi 0, %s43
    %s45 = sphi 0, %s43
    %s46 = sphi 0, %s45
    %s60 = sphi 0, %s46
    %s64 = sphi 0, %s64
    %s66 = sphi 0, %s64
    %s67 = sphi 0, %s66
    %s81 = sphi 0, %s67
    %s87 = sphi 0, %s89
    %s90 = sphi 0, %s87
    %s91 = sphi 0, %s90
    %s107 = sphi 0, %s91
  $region4: #{conv_block_forward.5} parent=0 // loop_header_branch
    %12 = sbr.rel (%p10) target = $region8
  $region5: #{conv_block_forward.5} parent=0 // loop_body
    %s14 = ssub.s32 %s9, 1
    %s15 = ssub.s32 %s9, 2
    %s16 = sadd.s32 %s9, 1
    %s17 = ssub.s32 %s9, %s16
    %p18 = scmp.eq.s32.totalorder %s17, 0
    %s20 = sadd.s32 %s19, 1
    %s21 = scalar_select %p18, %s19, %s20
    %p24 = pneg %p18
    %p25 = scmp.eq.s32.totalorder %s9, 1
    %p26 = por %p24, %p25
    %p27 = scmp.ne.s32.totalorder %s19, %s22
    %p28 = scmp.eq.s32.totalorder %s9, 0
    %p29 = por %p27, %p28
    %p30 = scmp.ne.s32.totalorder %s19, %s22
    %p31 = scmp.eq.s32.totalorder %s14, 1
    %p32 = por %p30, %p31
    %p33 = scmp.ne.s32.totalorder %s22, %s23
    %p34 = scmp.eq.s32.totalorder %s14, 0
    %p35 = por %p33, %p34
    %p36 = scmp.ne.s32.totalorder %s22, %s23
    %p37 = scmp.eq.s32.totalorder %s15, 1
    %p38 = por %p36, %p37
    %p40 = scmp.ne.s32.totalorder %s23, %s39
    %p41 = scmp.eq.s32.totalorder %s15, 0
    %p42 = por %p40, %p41
    %s44 = sadd.s32 %s43, 1
    %p47 = scmp.eq.s32.totalorder %s9, 1
    %p48 = scmp.ne.s32.totalorder %s43, %s45
    %p49 = scmp.eq.s32.totalorder %s9, 0
    %p50 = por %p48, %p49
    %p51 = scmp.ne.s32.totalorder %s43, %s45
    %p52 = scmp.eq.s32.totalorder %s14, 1
    %p53 = por %p51, %p52
    %p54 = scmp.ne.s32.totalorder %s45, %s46
    %p55 = scmp.eq.s32.totalorder %s14, 0
    %p56 = por %p54, %p55
    %p57 = scmp.ne.s32.totalorder %s45, %s46
    %p58 = scmp.eq.s32.totalorder %s15, 1
    %p59 = por %p57, %p58
    %p61 = scmp.ne.s32.totalorder %s46, %s60
    %p62 = scmp.eq.s32.totalorder %s15, 0
    %p63 = por %p61, %p62
    %s65 = sadd.s32 %s64, 1
    %p68 = scmp.eq.s32.totalorder %s9, 1
    %p69 = scmp.ne.s32.totalorder %s64, %s66
    %p70 = scmp.eq.s32.totalorder %s9, 0
    %p71 = por %p69, %p70
    %p72 = scmp.ne.s32.totalorder %s64, %s66
    %p73 = scmp.eq.s32.totalorder %s14, 1
    %p74 = por %p72, %p73
    %p75 = scmp.ne.s32.totalorder %s66, %s67
    %p76 = scmp.eq.s32.totalorder %s14, 0
    %p77 = por %p75, %p76
    %p78 = scmp.ne.s32.totalorder %s66, %s67
    %p79 = scmp.eq.s32.totalorder %s15, 1
    %p80 = por %p78, %p79
    %p82 = scmp.ne.s32.totalorder %s67, %s81
    %p83 = scmp.eq.s32.totalorder %s15, 0
    %p84 = por %p82, %p83
    %s85 = ssub.s32 %s9, %s16
    %p86 = scmp.eq.s32.totalorder %s85, 0
    %s88 = sadd.s32 %s87, 1
    %s89 = scalar_select %p86, %s87, %s88
    %p92 = pneg %p86
    %p93 = scmp.eq.s32.totalorder %s9, 1
    %p94 = por %p92, %p93
    %p95 = scmp.ne.s32.totalorder %s87, %s90
    %p96 = scmp.eq.s32.totalorder %s9, 0
    %p97 = por %p95, %p96
    %p98 = scmp.ne.s32.totalorder %s87, %s90
    %p99 = scmp.eq.s32.totalorder %s14, 1
    %p100 = por %p98, %p99
    %p101 = scmp.ne.s32.totalorder %s90, %s91
    %p102 = scmp.eq.s32.totalorder %s14, 0
    %p103 = por %p101, %p102
    %p104 = scmp.ne.s32.totalorder %s90, %s91
    %p105 = scmp.eq.s32.totalorder %s15, 1
    %p106 = por %p104, %p105
    %p108 = scmp.ne.s32.totalorder %s91, %s107
    %p109 = scmp.eq.s32.totalorder %s15, 0
    %p110 = por %p108, %p109
    %p111 = scmp.le.s32.totalorder 1, %s9
    %p112 = scmp.lt.s32.totalorder %s9, 3
    %p113 = pnand %p111, %p112
    %p114 = pneg %p113
    // Predicated region
    $region9: #{conv_block_forward.5} parent=5 // pred_check
      _
    $region10: #{conv_block_forward.5} parent=5 // pred_check_branch
      %116 = sbr.rel (%p113) target = $region12
    $region11: #{conv_block_forward.5} parent=5 // pred_region
      %s117 = ssub.s32 %s9, 1
      // Predicated region
      $region13: #{conv_block_forward.5} parent=11 // pred_check
        %p118 = pneg %p56
      $region14: #{conv_block_forward.5} parent=11 // pred_check_branch
        %120 = sbr.rel (%p118) target = $region16
      $region15: #{conv_block_forward.5} parent=11 // pred_region
        _
      $region16: #{conv_block_forward.5} parent=11 // pred_fallthru
        _
      // Predicated region
      $region17: #{conv_block_forward.5} parent=11 // pred_check
        %p121 = pneg %p77
      $region18: #{conv_block_forward.5} parent=11 // pred_check_branch
        %123 = sbr.rel (%p121) target = $region20
      $region19: #{conv_block_forward.5} parent=11 // pred_region
        _
      $region20: #{conv_block_forward.5} parent=11 // pred_fallthru
        _
    $region12: #{conv_block_forward.5} parent=5 // pred_fallthru
      _
    %p124 = scmp.lt.s32.totalorder %s9, 2
    // Predicated region
    $region21: #{conv_block_forward.5} parent=5 // pred_check
      %p125 = pneg %p124
    $region22: #{conv_block_forward.5} parent=5 // pred_check_branch
      %127 = sbr.rel (%p125) target = $region24
    $region23: #{conv_block_forward.5} parent=5 // pred_region
      // Predicated region
      $region25: #{conv_block_forward.5} parent=23 // pred_check
        %p128 = pneg %p29
      $region26: #{conv_block_forward.5} parent=23 // pred_check_branch
        %130 = sbr.rel (%p128) target = $region28
      $region27: #{conv_block_forward.5} parent=23 // pred_region
        %p131 = scmp.lt.s32.totalorder %s9, 1
        %s132 = scalar_select %p131, %s9, 1
        %s133 = smul.addr %s132, 2
        %s134 = smul.addr %s133, 8
        %s135 = scalar_lea.vmem %s0, %s134
      $region28: #{conv_block_forward.5} parent=23 // pred_fallthru
        _
    $region24: #{conv_block_forward.5} parent=5 // pred_fallthru
      _
    %p136 = scmp.le.s32.totalorder 1, %s9
    %p137 = scmp.lt.s32.totalorder %s9, 3
    %p138 = pnand %p136, %p137
    %p139 = pneg %p138
    // Predicated region
    $region29: #{conv_block_forward.5} parent=5 // pred_check
      _
    $region30: #{conv_block_forward.5} parent=5 // pred_check_branch
      %141 = sbr.rel (%p138) target = $region32
    $region31: #{conv_block_forward.5} parent=5 // pred_region
      %s142 = ssub.s32 %s9, 1
      %p143 = scmp.lt.s32.totalorder %s14, 1
      %s144 = scalar_select %p143, %s14, 1
      %s145 = smul.addr %s144, 2
      %s146 = smul.addr %s145, 8
      %s147 = scalar_lea.vmem %s0, %s146
      %p148 = pneg %p35
      %p149 = pneg %p32
      %p150 = pneg %p56
      %p151 = pneg %p53
      %p152 = pneg %p77
      %p153 = pneg %p74
      %p154 = pneg %p103
      %p155 = pneg %p100
      %p156 = scmp.lt.s32.totalorder %s14, 1
      %s157 = scalar_select %p156, %s14, 1
      %s158 = smul.addr %s157, 2
      %s159 = smul.addr %s158, 8
      %s160 = scalar_lea.vmem %s3, %s159
      %p161 = scmp.lt.s32.totalorder %s14, 1
      %s162 = scalar_select %p161, %s14, 1
      %s163 = smul.addr %s162, 2
      %s164 = smul.addr %s163, 8
      %s165 = scalar_lea.vmem %s0, %s164
      %p166 = scmp.lt.s32.totalorder %s14, 1
      %s167 = scalar_select %p166, %s14, 1
      %s168 = smul.addr %s167, 2
      %s169 = smul.addr %s168, 8
      %s170 = scalar_lea.vmem %s3, %s169
      %v171 = vld [vmem:[%s165] sm:$0xff]
      %v172 = vld [vmem:[%s165 + $0x8] sm:$0xff]
      %v173 = vld [vmem:[%s1] sm:$0x1]
      %v175 = vlaneseq
      %v176 = vshrl.u32 %v175, 7
      %v177 = vsub.s32 0, %v176
      %v178 = vrot.slane %v173, %v177
      %v180 = vmul.f32 %v171, %v178
      %v181 = vmul.f32 %v172, %v178
      %v182 = vld [vmem:[%s2] sm:$0x1]
      %v184 = vlaneseq
      %v185 = vshrl.u32 %v184, 7
      %v186 = vsub.s32 0, %v185
      %v187 = vrot.slane %v182, %v186
      %v189 = vadd.f32 %v180, %v187
      %v190 = vadd.f32 %v181, %v187
      %vm191 = vcmp.ge.f32.partialorder %v189, 0.0
      %vm192 = vcmp.ge.f32.partialorder %v190, 0.0
      %v193 = vmul.f32 %v189, 0.01
      %v194 = vmul.f32 %v190, 0.01
      %v195 = vsel %vm191, %v189, %v193
      %v196 = vsel %vm192, %v190, %v194
      %197 = vst [vmem:[%s170] sm:$0xff] %v195
      %198 = vst [vmem:[%s170 + $0x8] sm:$0xff] %v196
      %p199 = scmp.lt.s32.totalorder %s14, 1
      %s200 = scalar_select %p199, %s14, 1
      %s201 = smul.addr %s200, 2
      %s202 = smul.addr %s201, 8
      %s203 = scalar_lea.vmem %s3, %s202
      // Predicated region
      $region33: #{conv_block_forward.5} parent=31 // pred_check
        %p204 = pneg %p100
      $region34: #{conv_block_forward.5} parent=31 // pred_check_branch
        %206 = sbr.rel (%p204) target = $region36
      $region35: #{conv_block_forward.5} parent=31 // pred_region
        _
      $region36: #{conv_block_forward.5} parent=31 // pred_fallthru
        _
    $region32: #{conv_block_forward.5} parent=5 // pred_fallthru
      _
    %p207 = scmp.le.s32.totalorder 2, %s9
    // Predicated region
    $region37: #{conv_block_forward.5} parent=5 // pred_check
      %p208 = pneg %p207
    $region38: #{conv_block_forward.5} parent=5 // pred_check_branch
      %210 = sbr.rel (%p208) target = $region40
    $region39: #{conv_block_forward.5} parent=5 // pred_region
      %s211 = ssub.s32 %s9, 2
      // Predicated region
      $region41: #{conv_block_forward.5} parent=39 // pred_check
        %p212 = pneg %p106
      $region42: #{conv_block_forward.5} parent=39 // pred_check_branch
        %214 = sbr.rel (%p212) target = $region44
      $region43: #{conv_block_forward.5} parent=39 // pred_region
        %p215 = scmp.lt.s32.totalorder %s15, 1
        %s216 = scalar_select %p215, %s15, 1
        %s217 = smul.addr %s216, 2
        %s218 = smul.addr %s217, 8
        %s219 = scalar_lea.vmem %s3, %s218
      $region44: #{conv_block_forward.5} parent=39 // pred_fallthru
        _
    $region40: #{conv_block_forward.5} parent=5 // pred_fallthru
      _
  $region6: #{conv_block_forward.5} parent=0 // loop_footer
    %s13 = sadd.s32 1, %s9
  $region7: #{conv_block_forward.5} parent=0 // loop_footer_branch
    %8 = sbr.rel target = $region3
  $region8: #{conv_block_forward.5} parent=0 // loop_exit
    _

</llo_original>
